<compile_context>
chip_gen: v7x
topology: tpu7x:2x2x1
jax: 0.10.0
libtpu: 0.0.40
codegen_flags: <defaults>
</compile_context>

<pallas_src>
import functools

import jax
import jax.numpy as jnp
from jax.experimental import pallas as pl
from jax.experimental.pallas import tpu as pltpu


def _rdb_conv_kernel(x_ref, xpad_ref, w_ref, b_ref, out_ref,
                     *, W, Wp, Cin, G, K, tH, compute_dtype):
    # x_ref   : (1, Cin, tH, W)     f32  -- this strip of the unpadded input
    # xpad_ref: (1, Cin, Hp2, Wp)   f32  -- whole zero-padded image (resident per b)
    # w_ref   : (K*K, G, Cin)       compute_dtype -- per-tap weight slabs
    # b_ref   : (G, 1)              f32
    # out_ref : (1, Cin+G, tH, W)   f32
    s = pl.program_id(1)
    row0 = s * tH
    if tH % 8 == 0:
        row0 = pl.multiple_of(row0, 8)   # aligned sublane loads on the halo slab

    # 1) pass-through of the original input (exact f32, major-axis channel offset).
    out_ref[0, :Cin, :, :] = x_ref[0]

    # 2) Halo slab: rows [row0, row0 + tH + K) of the padded image, flattened so the
    #    spatial axis sits on lanes.  All K*K taps are static slices of this slab.
    halo = tH + K
    slab = xpad_ref[0, :, pl.ds(row0, halo), :]                # (Cin, halo, Wp)
    slab = slab.reshape(Cin, halo * Wp).astype(compute_dtype)  # spatial -> lanes

    # 3) Conv as K*K accumulated MXU pushes; result (G, tH*Wp), spatial on lanes.
    N = tH * Wp
    acc = None
    for kh in range(K):
        for kw in range(K):
            off = kh * Wp + kw                                  # static lane offset
            rhs = slab[:, off:off + N]                          # (Cin, tH*Wp)
            part = jnp.dot(w_ref[kh * K + kw], rhs,
                           preferred_element_type=jnp.float32)  # (G, tH*Wp) f32
            acc = part if acc is None else acc + part

    y = jnp.maximum(acc + b_ref[...], 0.0)                      # bias + ReLU
    # Drop the width-halo "junk" columns and store channels-first.
    y = y.reshape(G, tH, Wp)[:, :, :W]
    out_ref[0, Cin:, :, :] = y.astype(out_ref.dtype)


def _vmem_cap_bytes():
    try:
        return int(pltpu.get_tpu_info().vmem_capacity_bytes)
    except Exception:
        return 64 * 1024 * 1024   # conservative (v7x per-TC) fallback


def _auto_tile_h(H, W, Cin, Cout, K, vmem_cap):
    """Largest divisor of H (multiple of 8, or H itself) whose strip fits VMEM."""
    Wp = W + K - 1
    cands = sorted({d for d in range(1, H + 1)
                    if H % d == 0 and (d % 8 == 0 or d == H)}, reverse=True)
    budget = max(vmem_cap // 4, 8 * 1024 * 1024)
    for d in cands:
        per_strip = (2 * (Cin + Cout) * d * W * 4       # x / out blocks, dbl-buffered
                     + Cin * (d + K) * Wp * 8           # halo slab (f32 + cast copy)
                     + 3 * Cout * d * Wp * 4)           # acc / y / rhs headroom
        if per_strip <= budget:
            return d
    return cands[-1]   # smallest legal tile; never silently fall back to a huge one


def rdb_conv(x, weight, bias, kSize=3, tile_h=None, compute_dtype=jnp.bfloat16):
    """Pallas implementation of RDB_Conv.forward.

    x      : (B, Cin, H, W)  float32 (NCHW, as in PyTorch)
    weight : (G, Cin, K, K)  float32 (OIHW)
    bias   : (G,)            float32
    returns: (B, Cin + G, H, W) float32

    compute_dtype=jnp.bfloat16 rounds the matmul operands to bf16 (f32
    accumulation); pass jnp.float32 for bit-parity with an f32 conv.
    """
    B, Cin, H, W = x.shape
    G = weight.shape[0]
    K = kSize
    assert K % 2 == 1, "symmetric padding only matches PyTorch for odd kSize"
    pad = (K - 1) // 2
    Cout = Cin + G
    Wp = W + 2 * pad
    Hp2 = H + 2 * pad + 1   # +1 bottom zero row so the last tap's slab slice stays in bounds

    vmem_cap = _vmem_cap_bytes()
    if tile_h is None:
        tile_h = _auto_tile_h(H, W, Cin, Cout, K, vmem_cap)
    assert H % tile_h == 0 and (tile_h % 8 == 0 or tile_h == H), \
        "tile_h must divide H and be a multiple of 8 (or equal H)"
    n_strips = H // tile_h

    # Wrapper-side prep: a single zero-pad pass (XLA can fuse it with the producer
    # of x); no transposes anywhere.  Weight is pre-arranged as K*K (G, Cin) taps.
    x_pad = jnp.pad(x, ((0, 0), (0, 0), (pad, pad + 1), (pad, pad)))
    w_taps = (jnp.transpose(weight, (2, 3, 0, 1))        # (K, K, G, Cin)
              .reshape(K * K, G, Cin)
              .astype(compute_dtype))
    b_col = bias.reshape(G, 1).astype(jnp.float32)

    # Generation-aware VMEM budget from actual block / temp footprints.
    itemsize_c = jnp.dtype(compute_dtype).itemsize
    xpad_blk = Cin * Hp2 * Wp * 4
    x_blk = Cin * tile_h * W * 4
    out_blk = Cout * tile_h * W * 4
    w_bytes = K * K * G * Cin * itemsize_c
    slab_bytes = Cin * (tile_h + K) * Wp * (4 + itemsize_c)
    tmp_bytes = 2 * Cin * tile_h * Wp * itemsize_c + 3 * G * tile_h * Wp * 4
    need = 2 * (xpad_blk + x_blk + out_blk + w_bytes) + slab_bytes + tmp_bytes
    vmem_limit = int(min(max(int(1.5 * need), 32 * 1024 * 1024),
                         int(0.9 * vmem_cap)))

    kernel = functools.partial(
        _rdb_conv_kernel, W=W, Wp=Wp, Cin=Cin, G=G, K=K, tH=tile_h,
        compute_dtype=compute_dtype)

    out = pl.pallas_call(
        kernel,
        out_shape=jax.ShapeDtypeStruct((B, Cout, H, W), x.dtype),
        grid_spec=pltpu.PrefetchScalarGridSpec(
            num_scalar_prefetch=0,
            grid=(B, n_strips),
            in_specs=[
                # Unpadded input strip for the exact pass-through copy.
                pl.BlockSpec((1, Cin, tile_h, W), lambda b, s: (b, 0, s, 0)),
                # Whole padded image per batch element (resident across strips).
                pl.BlockSpec((1, Cin, Hp2, Wp), lambda b, s: (b, 0, 0, 0)),
                # Per-tap weight slabs / bias, constant across the grid.
                pl.BlockSpec((K * K, G, Cin), lambda b, s: (0, 0, 0)),
                pl.BlockSpec((G, 1), lambda b, s: (0, 0)),
            ],
            out_specs=pl.BlockSpec((1, Cout, tile_h, W),
                                   lambda b, s: (b, 0, s, 0)),
        ),
        compiler_params=pltpu.CompilerParams(
            dimension_semantics=("parallel", "parallel"),
            vmem_limit_bytes=vmem_limit),
    )(x, x_pad, w_taps, b_col)

    return out   # already NCHW -- no wrapper post-processing


def _reference(x, weight, bias, kSize=3, compute_dtype=jnp.bfloat16):
    # Reference with the same operand rounding as the kernel (f32 accumulation).
    pad = (kSize - 1) // 2
    conv = jax.lax.conv_general_dilated(
        x.astype(compute_dtype), weight.astype(compute_dtype),
        window_strides=(1, 1),
        padding=((pad, pad), (pad, pad)),
        dimension_numbers=("NCHW", "OIHW", "NCHW"),
        preferred_element_type=jnp.float32)
    conv = jax.nn.relu(conv + bias[None, :, None, None].astype(jnp.float32))
    return jnp.concatenate([x, conv.astype(x.dtype)], axis=1)


if __name__ == "__main__":
    B, Cin, G, H, W, K = 2, 8, 8, 16, 16, 3

    key = jax.random.PRNGKey(0)
    kx, kw, kb = jax.random.split(key, 3)
    x = jax.random.normal(kx, (B, Cin, H, W), dtype=jnp.float32)
    # Deterministic synthetic parameters matching nn.Conv2d(Cin, G, K) shapes.
    weight = 0.1 * jax.random.normal(kw, (G, Cin, K, K), dtype=jnp.float32)
    bias = 0.1 * jax.random.normal(kb, (G,), dtype=jnp.float32)

    # tile_h=8 -> 2 row strips per image, exercising the (B, strips) grid.
    out = rdb_conv(x, weight, bias, kSize=K, tile_h=8)
    out = jax.block_until_ready(out)

    ref = _reference(x, weight, bias, kSize=K)
    assert out.shape == (B, Cin + G, H, W)
    err = float(jnp.max(jnp.abs(out - ref)))
    assert jnp.allclose(out, ref, atol=2e-3, rtol=2e-3), err

    print("KERNEL_OK")
</pallas_src>

<mosaic_0001>
module attributes {stable_mosaic.version = 11 : i64} {
  func.func @_rdb_conv_kernel(%arg0: i32, %arg1: i32, %arg2: memref<1x8x8x16xf32, #tpu.memory_space<vmem>>, %arg3: memref<1x8x19x18xf32, #tpu.memory_space<vmem>>, %arg4: memref<9x8x8xbf16, #tpu.memory_space<vmem>>, %arg5: memref<8x1xf32, #tpu.memory_space<vmem>>, %arg6: memref<1x16x8x16xf32, #tpu.memory_space<vmem>>) attributes {dimension_semantics = [#tpu.dimension_semantics<parallel>, #tpu.dimension_semantics<parallel>], iteration_bounds = array<i64: 2, 2>, scalar_prefetch = 0 : i64, scratch_operands = 0 : i64, tpu.core_type = #tpu.core_type<tc>, window_params = [{transform_indices = @transform_0, window_bounds = array<i64: 1, 8, 8, 16>}, {transform_indices = @transform_1, window_bounds = array<i64: 1, 8, 19, 18>}, {pipeline_mode = #tpu.pipeline_mode<synchronous>, transform_indices = @transform_2, window_bounds = array<i64: 9, 8, 8>}, {pipeline_mode = #tpu.pipeline_mode<synchronous>, transform_indices = @transform_3, window_bounds = array<i64: 8, 1>}, {transform_indices = @transform_4, window_bounds = array<i64: 1, 16, 8, 16>}]} {
    %c8_i32 = arith.constant 8 : i32
    %0 = arith.muli %arg1, %c8_i32 : i32
    %1 = tpu.assume_multiple %0, 8 : i32
    %c0 = arith.constant 0 : index
    %c0_0 = arith.constant 0 : index
    %c0_1 = arith.constant 0 : index
    %c0_2 = arith.constant 0 : index
    %2 = vector.load %arg2[%c0, %c0_0, %c0_1, %c0_2] : memref<1x8x8x16xf32, #tpu.memory_space<vmem>>, vector<1x8x8x16xf32>
    %3 = vector.shape_cast %2 : vector<1x8x8x16xf32> to vector<8x8x16xf32>
    %c0_3 = arith.constant 0 : index
    %c0_4 = arith.constant 0 : index
    %c0_5 = arith.constant 0 : index
    %c0_6 = arith.constant 0 : index
    %4 = vector.load %arg6[%c0_3, %c0_4, %c0_5, %c0_6] : memref<1x16x8x16xf32, #tpu.memory_space<vmem>>, vector<1x8x8x16xf32>
    %5 = vector.shape_cast %4 : vector<1x8x8x16xf32> to vector<8x8x16xf32>
    %6 = vector.shape_cast %3 : vector<8x8x16xf32> to vector<1x8x8x16xf32>
    tpu.vector_store %arg6[%c0_3, %c0_4, %c0_5, %c0_6], %6 {strides = array<i32>} : memref<1x16x8x16xf32, #tpu.memory_space<vmem>>, vector<1x8x8x16xf32>,
    %c0_7 = arith.constant 0 : index
    %c0_8 = arith.constant 0 : index
    %7 = arith.index_cast %1 : i32 to index
    %c0_9 = arith.constant 0 : index
    %8 = vector.load %arg3[%c0_7, %c0_8, %7, %c0_9] : memref<1x8x19x18xf32, #tpu.memory_space<vmem>>, vector<1x8x11x18xf32>
    %9 = vector.shape_cast %8 : vector<1x8x11x18xf32> to vector<8x11x18xf32>
    %10 = vector.shape_cast %9 : vector<8x11x18xf32> to vector<8x198xf32>
    %11 = arith.truncf %10 : vector<8x198xf32> to vector<8x198xbf16>
    %12 = vector.extract_strided_slice %11 {offsets = [0, 0], sizes = [8, 144], strides = [1, 1]} : vector<8x198xbf16> to vector<8x144xbf16>
    %c0_10 = arith.constant 0 : index
    %c0_11 = arith.constant 0 : index
    %c0_12 = arith.constant 0 : index
    %13 = vector.load %arg4[%c0_10, %c0_11, %c0_12] : memref<9x8x8xbf16, #tpu.memory_space<vmem>>, vector<1x8x8xbf16>
    %14 = vector.shape_cast %13 : vector<1x8x8xbf16> to vector<8x8xbf16>
    %cst = arith.constant dense<0.000000e+00> : vector<8x144xf32>
    %15 = tpu.matmul %14, %12, %cst {dimension_numbers = #tpu.dot_dimension_numbers<[1], [0], [0], [1], [0, 0, 1, 1], [], []>} : vector<8x8xbf16>, vector<8x144xbf16>, vector<8x144xf32> -> vector<8x144xf32>
    %16 = vector.extract_strided_slice %11 {offsets = [0, 1], sizes = [8, 144], strides = [1, 1]} : vector<8x198xbf16> to vector<8x144xbf16>
    %c1 = arith.constant 1 : index
    %c0_13 = arith.constant 0 : index
    %c0_14 = arith.constant 0 : index
    %17 = vector.load %arg4[%c1, %c0_13, %c0_14] : memref<9x8x8xbf16, #tpu.memory_space<vmem>>, vector<1x8x8xbf16>
    %18 = vector.shape_cast %17 : vector<1x8x8xbf16> to vector<8x8xbf16>
    %cst_15 = arith.constant dense<0.000000e+00> : vector<8x144xf32>
    %19 = tpu.matmul %18, %16, %cst_15 {dimension_numbers = #tpu.dot_dimension_numbers<[1], [0], [0], [1], [0, 0, 1, 1], [], []>} : vector<8x8xbf16>, vector<8x144xbf16>, vector<8x144xf32> -> vector<8x144xf32>
    %20 = arith.addf %15, %19 : vector<8x144xf32>
    %21 = vector.extract_strided_slice %11 {offsets = [0, 2], sizes = [8, 144], strides = [1, 1]} : vector<8x198xbf16> to vector<8x144xbf16>
    %c2 = arith.constant 2 : index
    %c0_16 = arith.constant 0 : index
    %c0_17 = arith.constant 0 : index
    %22 = vector.load %arg4[%c2, %c0_16, %c0_17] : memref<9x8x8xbf16, #tpu.memory_space<vmem>>, vector<1x8x8xbf16>
    %23 = vector.shape_cast %22 : vector<1x8x8xbf16> to vector<8x8xbf16>
    %cst_18 = arith.constant dense<0.000000e+00> : vector<8x144xf32>
    %24 = tpu.matmul %23, %21, %cst_18 {dimension_numbers = #tpu.dot_dimension_numbers<[1], [0], [0], [1], [0, 0, 1, 1], [], []>} : vector<8x8xbf16>, vector<8x144xbf16>, vector<8x144xf32> -> vector<8x144xf32>
    %25 = arith.addf %20, %24 : vector<8x144xf32>
    %26 = vector.extract_strided_slice %11 {offsets = [0, 18], sizes = [8, 144], strides = [1, 1]} : vector<8x198xbf16> to vector<8x144xbf16>
    %c3 = arith.constant 3 : index
    %c0_19 = arith.constant 0 : index
    %c0_20 = arith.constant 0 : index
    %27 = vector.load %arg4[%c3, %c0_19, %c0_20] : memref<9x8x8xbf16, #tpu.memory_space<vmem>>, vector<1x8x8xbf16>
    %28 = vector.shape_cast %27 : vector<1x8x8xbf16> to vector<8x8xbf16>
    %cst_21 = arith.constant dense<0.000000e+00> : vector<8x144xf32>
    %29 = tpu.matmul %28, %26, %cst_21 {dimension_numbers = #tpu.dot_dimension_numbers<[1], [0], [0], [1], [0, 0, 1, 1], [], []>} : vector<8x8xbf16>, vector<8x144xbf16>, vector<8x144xf32> -> vector<8x144xf32>
    %30 = arith.addf %25, %29 : vector<8x144xf32>
    %31 = vector.extract_strided_slice %11 {offsets = [0, 19], sizes = [8, 144], strides = [1, 1]} : vector<8x198xbf16> to vector<8x144xbf16>
    %c4 = arith.constant 4 : index
    %c0_22 = arith.constant 0 : index
    %c0_23 = arith.constant 0 : index
    %32 = vector.load %arg4[%c4, %c0_22, %c0_23] : memref<9x8x8xbf16, #tpu.memory_space<vmem>>, vector<1x8x8xbf16>
    %33 = vector.shape_cast %32 : vector<1x8x8xbf16> to vector<8x8xbf16>
    %cst_24 = arith.constant dense<0.000000e+00> : vector<8x144xf32>
    %34 = tpu.matmul %33, %31, %cst_24 {dimension_numbers = #tpu.dot_dimension_numbers<[1], [0], [0], [1], [0, 0, 1, 1], [], []>} : vector<8x8xbf16>, vector<8x144xbf16>, vector<8x144xf32> -> vector<8x144xf32>
    %35 = arith.addf %30, %34 : vector<8x144xf32>
    %36 = vector.extract_strided_slice %11 {offsets = [0, 20], sizes = [8, 144], strides = [1, 1]} : vector<8x198xbf16> to vector<8x144xbf16>
    %c5 = arith.constant 5 : index
    %c0_25 = arith.constant 0 : index
    %c0_26 = arith.constant 0 : index
    %37 = vector.load %arg4[%c5, %c0_25, %c0_26] : memref<9x8x8xbf16, #tpu.memory_space<vmem>>, vector<1x8x8xbf16>
    %38 = vector.shape_cast %37 : vector<1x8x8xbf16> to vector<8x8xbf16>
    %cst_27 = arith.constant dense<0.000000e+00> : vector<8x144xf32>
    %39 = tpu.matmul %38, %36, %cst_27 {dimension_numbers = #tpu.dot_dimension_numbers<[1], [0], [0], [1], [0, 0, 1, 1], [], []>} : vector<8x8xbf16>, vector<8x144xbf16>, vector<8x144xf32> -> vector<8x144xf32>
    %40 = arith.addf %35, %39 : vector<8x144xf32>
    %41 = vector.extract_strided_slice %11 {offsets = [0, 36], sizes = [8, 144], strides = [1, 1]} : vector<8x198xbf16> to vector<8x144xbf16>
    %c6 = arith.constant 6 : index
    %c0_28 = arith.constant 0 : index
    %c0_29 = arith.constant 0 : index
    %42 = vector.load %arg4[%c6, %c0_28, %c0_29] : memref<9x8x8xbf16, #tpu.memory_space<vmem>>, vector<1x8x8xbf16>
    %43 = vector.shape_cast %42 : vector<1x8x8xbf16> to vector<8x8xbf16>
    %cst_30 = arith.constant dense<0.000000e+00> : vector<8x144xf32>
    %44 = tpu.matmul %43, %41, %cst_30 {dimension_numbers = #tpu.dot_dimension_numbers<[1], [0], [0], [1], [0, 0, 1, 1], [], []>} : vector<8x8xbf16>, vector<8x144xbf16>, vector<8x144xf32> -> vector<8x144xf32>
    %45 = arith.addf %40, %44 : vector<8x144xf32>
    %46 = vector.extract_strided_slice %11 {offsets = [0, 37], sizes = [8, 144], strides = [1, 1]} : vector<8x198xbf16> to vector<8x144xbf16>
    %c7 = arith.constant 7 : index
    %c0_31 = arith.constant 0 : index
    %c0_32 = arith.constant 0 : index
    %47 = vector.load %arg4[%c7, %c0_31, %c0_32] : memref<9x8x8xbf16, #tpu.memory_space<vmem>>, vector<1x8x8xbf16>
    %48 = vector.shape_cast %47 : vector<1x8x8xbf16> to vector<8x8xbf16>
    %cst_33 = arith.constant dense<0.000000e+00> : vector<8x144xf32>
    %49 = tpu.matmul %48, %46, %cst_33 {dimension_numbers = #tpu.dot_dimension_numbers<[1], [0], [0], [1], [0, 0, 1, 1], [], []>} : vector<8x8xbf16>, vector<8x144xbf16>, vector<8x144xf32> -> vector<8x144xf32>
    %50 = arith.addf %45, %49 : vector<8x144xf32>
    %51 = vector.extract_strided_slice %11 {offsets = [0, 38], sizes = [8, 144], strides = [1, 1]} : vector<8x198xbf16> to vector<8x144xbf16>
    %c8 = arith.constant 8 : index
    %c0_34 = arith.constant 0 : index
    %c0_35 = arith.constant 0 : index
    %52 = vector.load %arg4[%c8, %c0_34, %c0_35] : memref<9x8x8xbf16, #tpu.memory_space<vmem>>, vector<1x8x8xbf16>
    %53 = vector.shape_cast %52 : vector<1x8x8xbf16> to vector<8x8xbf16>
    %cst_36 = arith.constant dense<0.000000e+00> : vector<8x144xf32>
    %54 = tpu.matmul %53, %51, %cst_36 {dimension_numbers = #tpu.dot_dimension_numbers<[1], [0], [0], [1], [0, 0, 1, 1], [], []>} : vector<8x8xbf16>, vector<8x144xbf16>, vector<8x144xf32> -> vector<8x144xf32>
    %55 = arith.addf %50, %54 : vector<8x144xf32>
    %c0_37 = arith.constant 0 : index
    %c0_38 = arith.constant 0 : index
    %56 = vector.load %arg5[%c0_37, %c0_38] : memref<8x1xf32, #tpu.memory_space<vmem>>, vector<8x1xf32>
    %57 = vector.broadcast %56 : vector<8x1xf32> to vector<8x144xf32>
    %58 = arith.addf %55, %57 : vector<8x144xf32>
    %cst_39 = arith.constant 0.000000e+00 : f32
    %59 = vector.broadcast %cst_39 : f32 to vector<8x144xf32>
    %60 = arith.maximumf %58, %59 : vector<8x144xf32>
    %61 = vector.shape_cast %60 : vector<8x144xf32> to vector<8x8x18xf32>
    %62 = vector.extract_strided_slice %61 {offsets = [0, 0, 0], sizes = [8, 8, 16], strides = [1, 1, 1]} : vector<8x8x18xf32> to vector<8x8x16xf32>
    %c0_40 = arith.constant 0 : index
    %c8_41 = arith.constant 8 : index
    %c0_42 = arith.constant 0 : index
    %c0_43 = arith.constant 0 : index
    %63 = vector.load %arg6[%c0_40, %c8_41, %c0_42, %c0_43] : memref<1x16x8x16xf32, #tpu.memory_space<vmem>>, vector<1x8x8x16xf32>
    %64 = vector.shape_cast %63 : vector<1x8x8x16xf32> to vector<8x8x16xf32>
    %65 = vector.shape_cast %62 : vector<8x8x16xf32> to vector<1x8x8x16xf32>
    tpu.vector_store %arg6[%c0_40, %c8_41, %c0_42, %c0_43], %65 {strides = array<i32>} : memref<1x16x8x16xf32, #tpu.memory_space<vmem>>, vector<1x8x8x16xf32>,
    return
  }
  func.func @transform_0(%arg0: i32, %arg1: i32) -> (i32, i32, i32, i32) {
    %c0_i32 = arith.constant 0 : i32
    %c0_i32_0 = arith.constant 0 : i32
    %c0_i32_1 = arith.constant 0 : i32
    return %arg0, %c0_i32, %arg1, %c0_i32_0 : i32, i32, i32, i32
  }
  func.func @transform_1(%arg0: i32, %arg1: i32) -> (i32, i32, i32, i32) {
    %c0_i32 = arith.constant 0 : i32
    %c0_i32_0 = arith.constant 0 : i32
    %c0_i32_1 = arith.constant 0 : i32
    %c0_i32_2 = arith.constant 0 : i32
    return %arg0, %c0_i32, %c0_i32_0, %c0_i32_1 : i32, i32, i32, i32
  }
  func.func @transform_2(%arg0: i32, %arg1: i32) -> (i32, i32, i32) {
    %c0_i32 = arith.constant 0 : i32
    %c0_i32_0 = arith.constant 0 : i32
    %c0_i32_1 = arith.constant 0 : i32
    %c0_i32_2 = arith.constant 0 : i32
    return %c0_i32, %c0_i32_0, %c0_i32_1 : i32, i32, i32
  }
  func.func @transform_3(%arg0: i32, %arg1: i32) -> (i32, i32) {
    %c0_i32 = arith.constant 0 : i32
    %c0_i32_0 = arith.constant 0 : i32
    %c0_i32_1 = arith.constant 0 : i32
    return %c0_i32, %c0_i32_0 : i32, i32
  }
  func.func @transform_4(%arg0: i32, %arg1: i32) -> (i32, i32, i32, i32) {
    %c0_i32 = arith.constant 0 : i32
    %c0_i32_0 = arith.constant 0 : i32
    %c0_i32_1 = arith.constant 0 : i32
    return %arg0, %c0_i32, %arg1, %c0_i32_0 : i32, i32, i32, i32
  }
}

</mosaic_0001>

<llo_original>
// kernel: tpu_custom_call.1
$region0: #{tpu_custom_call.1}
  #allocation0 [shape = 'u32[]', space=smem, size = 0x4, offset = 0x4, fixed_abs, tag = 'smem constant byte address 0x4 - core index']
  #allocation1 [shape = 'u32[144,128]{1,0:T(1,128)}', space=vmem, size = 0x12000, scoped, tag = 'internal scratch']
  %s0 = inlined_call_operand.vmem [shape: f32[2,8,16,16], index: 0, kind: input, shape index: {}]
  %s1 = inlined_call_operand.vmem [shape: f32[2,8,19,18], index: 1, kind: input, shape index: {}]
  %s2 = inlined_call_operand.vmem [shape: bf16[9,8,8], index: 2, kind: input, shape index: {}]
  %s3 = inlined_call_operand.vmem [shape: f32[8,1], index: 3, kind: input, shape index: {}]
  %s4 = inlined_call_operand.hbm [shape: f32[2,16,16,16], index: 4, kind: output, shape index: {}]
  %s5 = sld [smem:[#allocation0]]
  $region87: #{tpu_custom_call.1} parent=0
    _
  %s7 = ssub.s32 1, %s5
  %s8 = scalar_select 0, %s7, %s5
  $region1: #{tpu_custom_call.1} parent=0
    #allocation2 [shape = 'u8[65536]{0}', space=vmem, size = 0x10000, scoped, tag = 'input window, operand 0']
    #allocation3 [shape = 'u8[131072]{0}', space=vmem, size = 0x20000, scoped, tag = 'output window, operand 0']
    #allocation4 [shape = 's32[2]{0}', space=sflag, size = 0x8, scoped, tag = 'scoped memory for tpu_custom_call.1']
    %9 = vsyncpa [#allocation4], 0
    %s10 = scalar_lea.sflag [#allocation4], 1
    %11 = vsyncpa %s10, 0
    loop: start=0, step=1, limit=6
    $region2: #{tpu_custom_call.1} parent=1 // loop_pre_header
      _
    $region3: #{tpu_custom_call.1} parent=1 // loop_header
      %s13 = sphi 0, %s17
      %p14 = scmp.ge.s32.totalorder %s13, 6
      %s20 = sphi 0, %s32
      %s21 = sphi 0, %s28
      %s22 = sphi 0, %s20
      %s23 = sphi 0, %s21
      %s24 = sphi 0, %s22
      %s25 = sphi 0, %s23
      %s37 = sphi 0, %s39
      %s40 = sphi 0, %s37
      %s41 = sphi 0, %s40
      %s57 = sphi 0, %s41
      %s63 = sphi 0, %s65
      %s66 = sphi 0, %s63
      %s67 = sphi 0, %s66
      %s83 = sphi 0, %s67
      %s87 = sphi 0, %s87
      %s89 = sphi 0, %s87
      %s90 = sphi 0, %s89
      %s104 = sphi 0, %s90
      %s108 = sphi 0, %s108
      %s110 = sphi 0, %s108
      %s111 = sphi 0, %s110
      %s125 = sphi 0, %s111
      %s133 = sphi 0, %s135
      %s136 = sphi 0, %s133
      %s137 = sphi 0, %s136
      %s153 = sphi 0, %s137
    $region4: #{tpu_custom_call.1} parent=1 // loop_header_branch
      %16 = sbr.rel (%p14) target = $region8
    $region5: #{tpu_custom_call.1} parent=1 // loop_body
      %s18 = ssub.s32 %s13, 1
      %s19 = ssub.s32 %s13, 2
      %s26 = sadd.s32 1, %s21
      %p27 = scmp.ge.s32.totalorder %s26, 2
      %s28 = scalar_select %p27, 0, %s26
      %s29 = sadd.s32 1, %s20
      %s30 = scalar_select %p27, %s29, %s20
      %p31 = scmp.ge.s32.totalorder %s30, 2
      %s32 = scalar_select %p31, 0, %s30
      %s33 = ssub.s32 %s20, %s32
      %s34 = ssub.s32 %s21, %s28
      %s35 = sor.u32 %s33, %s34
      %p36 = scmp.eq.s32.totalorder %s35, 0
      %s38 = sadd.s32 %s37, 1
      %s39 = scalar_select %p36, %s37, %s38
      %p42 = pneg %p36
      %p43 = scmp.eq.s32.totalorder %s13, 3
      %p44 = por %p42, %p43
      %p45 = scmp.ne.s32.totalorder %s37, %s40
      %p46 = scmp.eq.s32.totalorder %s13, 0
      %p47 = por %p45, %p46
      %p48 = scmp.ne.s32.totalorder %s37, %s40
      %p49 = scmp.eq.s32.totalorder %s18, 3
      %p50 = por %p48, %p49
      %p51 = scmp.ne.s32.totalorder %s40, %s41
      %p52 = scmp.eq.s32.totalorder %s18, 0
      %p53 = por %p51, %p52
      %p54 = scmp.ne.s32.totalorder %s40, %s41
      %p55 = scmp.eq.s32.totalorder %s19, 3
      %p56 = por %p54, %p55
      %p58 = scmp.ne.s32.totalorder %s41, %s57
      %p59 = scmp.eq.s32.totalorder %s19, 0
      %p60 = por %p58, %p59
      %s61 = ssub.s32 %s20, %s32
      %p62 = scmp.eq.s32.totalorder %s61, 0
      %s64 = sadd.s32 %s63, 1
      %s65 = scalar_select %p62, %s63, %s64
      %p68 = pneg %p62
      %p69 = scmp.eq.s32.totalorder %s13, 3
      %p70 = por %p68, %p69
      %p71 = scmp.ne.s32.totalorder %s63, %s66
      %p72 = scmp.eq.s32.totalorder %s13, 0
      %p73 = por %p71, %p72
      %p74 = scmp.ne.s32.totalorder %s63, %s66
      %p75 = scmp.eq.s32.totalorder %s18, 3
      %p76 = por %p74, %p75
      %p77 = scmp.ne.s32.totalorder %s66, %s67
      %p78 = scmp.eq.s32.totalorder %s18, 0
      %p79 = por %p77, %p78
      %p80 = scmp.ne.s32.totalorder %s66, %s67
      %p81 = scmp.eq.s32.totalorder %s19, 3
      %p82 = por %p80, %p81
      %p84 = scmp.ne.s32.totalorder %s67, %s83
      %p85 = scmp.eq.s32.totalorder %s19, 0
      %p86 = por %p84, %p85
      %s88 = sadd.s32 %s87, 1
      %p91 = scmp.eq.s32.totalorder %s13, 3
      %p92 = scmp.ne.s32.totalorder %s87, %s89
      %p93 = scmp.eq.s32.totalorder %s13, 0
      %p94 = por %p92, %p93
      %p95 = scmp.ne.s32.totalorder %s87, %s89
      %p96 = scmp.eq.s32.totalorder %s18, 3
      %p97 = por %p95, %p96
      %p98 = scmp.ne.s32.totalorder %s89, %s90
      %p99 = scmp.eq.s32.totalorder %s18, 0
      %p100 = por %p98, %p99
      %p101 = scmp.ne.s32.totalorder %s89, %s90
      %p102 = scmp.eq.s32.totalorder %s19, 3
      %p103 = por %p101, %p102
      %p105 = scmp.ne.s32.totalorder %s90, %s104
      %p106 = scmp.eq.s32.totalorder %s19, 0
      %p107 = por %p105, %p106
      %s109 = sadd.s32 %s108, 1
      %p112 = scmp.eq.s32.totalorder %s13, 3
      %p113 = scmp.ne.s32.totalorder %s108, %s110
      %p114 = scmp.eq.s32.totalorder %s13, 0
      %p115 = por %p113, %p114
      %p116 = scmp.ne.s32.totalorder %s108, %s110
      %p117 = scmp.eq.s32.totalorder %s18, 3
      %p118 = por %p116, %p117
      %p119 = scmp.ne.s32.totalorder %s110, %s111
      %p120 = scmp.eq.s32.totalorder %s18, 0
      %p121 = por %p119, %p120
      %p122 = scmp.ne.s32.totalorder %s110, %s111
      %p123 = scmp.eq.s32.totalorder %s19, 3
      %p124 = por %p122, %p123
      %p126 = scmp.ne.s32.totalorder %s111, %s125
      %p127 = scmp.eq.s32.totalorder %s19, 0
      %p128 = por %p126, %p127
      %s129 = ssub.s32 %s20, %s32
      %s130 = ssub.s32 %s21, %s28
      %s131 = sor.u32 %s129, %s130
      %p132 = scmp.eq.s32.totalorder %s131, 0
      %s134 = sadd.s32 %s133, 1
      %s135 = scalar_select %p132, %s133, %s134
      %p138 = pneg %p132
      %p139 = scmp.eq.s32.totalorder %s13, 3
      %p140 = por %p138, %p139
      %p141 = scmp.ne.s32.totalorder %s133, %s136
      %p142 = scmp.eq.s32.totalorder %s13, 0
      %p143 = por %p141, %p142
      %p144 = scmp.ne.s32.totalorder %s133, %s136
      %p145 = scmp.eq.s32.totalorder %s18, 3
      %p146 = por %p144, %p145
      %p147 = scmp.ne.s32.totalorder %s136, %s137
      %p148 = scmp.eq.s32.totalorder %s18, 0
      %p149 = por %p147, %p148
      %p150 = scmp.ne.s32.totalorder %s136, %s137
      %p151 = scmp.eq.s32.totalorder %s19, 3
      %p152 = por %p150, %p151
      %p154 = scmp.ne.s32.totalorder %s137, %s153
      %p155 = scmp.eq.s32.totalorder %s19, 0
      %p156 = por %p154, %p155
      %p157 = scmp.le.s32.totalorder 1, %s13
      %p158 = scmp.lt.s32.totalorder %s13, 5
      %p159 = pnand %p157, %p158
      %p160 = pneg %p159
      // Predicated region
      $region9: #{tpu_custom_call.1} parent=5 // pred_check
        _
      $region10: #{tpu_custom_call.1} parent=5 // pred_check_branch
        %162 = sbr.rel (%p159) target = $region12
      $region11: #{tpu_custom_call.1} parent=5 // pred_region
        %s163 = ssub.s32 %s13, 1
        // Predicated region
        $region13: #{tpu_custom_call.1} parent=11 // pred_check
          %p164 = pneg %p100
        $region14: #{tpu_custom_call.1} parent=11 // pred_check_branch
          %166 = sbr.rel (%p164) target = $region16
        $region15: #{tpu_custom_call.1} parent=11 // pred_region
          _
        $region16: #{tpu_custom_call.1} parent=11 // pred_fallthru
          _
        // Predicated region
        $region17: #{tpu_custom_call.1} parent=11 // pred_check
          %p167 = pneg %p121
        $region18: #{tpu_custom_call.1} parent=11 // pred_check_branch
          %169 = sbr.rel (%p167) target = $region20
        $region19: #{tpu_custom_call.1} parent=11 // pred_region
          _
        $region20: #{tpu_custom_call.1} parent=11 // pred_fallthru
          _
      $region12: #{tpu_custom_call.1} parent=5 // pred_fallthru
        _
      %p170 = scmp.lt.s32.totalorder %s13, 4
      // Predicated region
      $region21: #{tpu_custom_call.1} parent=5 // pred_check
        %p171 = pneg %p170
      $region22: #{tpu_custom_call.1} parent=5 // pred_check_branch
        %173 = sbr.rel (%p171) target = $region24
      $region23: #{tpu_custom_call.1} parent=5 // pred_region
        // Predicated region
        $region25: #{tpu_custom_call.1} parent=23 // pred_check
          %p174 = pneg %p47
        $region26: #{tpu_custom_call.1} parent=23 // pred_check_branch
          %176 = sbr.rel (%p174) target = $region28
        $region27: #{tpu_custom_call.1} parent=23 // pred_region
          %s177 = sand.u32 %s37, 1
          %s178 = sand.u32 %s37, 1
          %s179 = smul.addr %s178, 64
          %s180 = scalar_lea.vmem [#allocation2], %s179
          %s181 = smul.addr %s20, 16
          %s182 = sadd.s32 %s21, %s181
          %s183 = smul.addr %s182, 8
          %s184 = scalar_lea.vmem %s0, %s183
          // Predicated region
          $region29: #{tpu_custom_call.1} parent=27 // pred_check
            _
          $region30: #{tpu_custom_call.1} parent=27 // pred_check_branch
            %186 = sbr.rel (0) target = $region32
          $region31: #{tpu_custom_call.1} parent=27 // pred_region
            // Predicated region
            $region33: #{tpu_custom_call.1} parent=31 // pred_check
              _
            $region34: #{tpu_custom_call.1} parent=31 // pred_check_branch
              %188 = sbr.rel (0) target = $region36
            $region35: #{tpu_custom_call.1} parent=31 // pred_region
              // Predicated region
              $region48: #{tpu_custom_call.1} parent=35 // pred_check
                _
              $region49: #{tpu_custom_call.1} parent=35 // pred_check_branch
                %217 = sbr.rel (0) target = $region51
              $region50: #{tpu_custom_call.1} parent=35 // pred_region
                loop: start=0, step=1, limit=1
                $region52: #{tpu_custom_call.1} parent=50 // loop_pre_header
                  _
                $region53: #{tpu_custom_call.1} parent=50 // loop_header
                  %s219 = sphi 0, %s223
                  %p220 = scmp.ge.s32.totalorder %s219, 1
                  %s224 = sphi %s184, %s184
                  %s225 = sphi %s180, %s180
                $region54: #{tpu_custom_call.1} parent=50 // loop_header_branch
                  %222 = sbr.rel (%p220) target = $region58
                $region55: #{tpu_custom_call.1} parent=50 // loop_body
                  %v226 = vld [vmem:[%s224] sm:$0xff]
                  %227 = vst [vmem:[%s225] sm:$0xff] %v226
                  %v228 = vld [vmem:[%s224 + $0x10] sm:$0xff]
                  %229 = vst [vmem:[%s225 + $0x8] sm:$0xff] %v228
                  %v230 = vld [vmem:[%s224 + $0x20] sm:$0xff]
                  %231 = vst [vmem:[%s225 + $0x10] sm:$0xff] %v230
                  %v232 = vld [vmem:[%s224 + $0x30] sm:$0xff]
                  %233 = vst [vmem:[%s225 + $0x18] sm:$0xff] %v232
                  %v234 = vld [vmem:[%s224 + $0x40] sm:$0xff]
                  %235 = vst [vmem:[%s225 + $0x20] sm:$0xff] %v234
                  %v236 = vld [vmem:[%s224 + $0x50] sm:$0xff]
                  %237 = vst [vmem:[%s225 + $0x28] sm:$0xff] %v236
                  %v238 = vld [vmem:[%s224 + $0x60] sm:$0xff]
                  %239 = vst [vmem:[%s225 + $0x30] sm:$0xff] %v238
                  %v240 = vld [vmem:[%s224 + $0x70] sm:$0xff]
                  %241 = vst [vmem:[%s225 + $0x38] sm:$0xff] %v240
                $region56: #{tpu_custom_call.1} parent=50 // loop_footer
                  %s223 = sadd.s32 1, %s219
                $region57: #{tpu_custom_call.1} parent=50 // loop_footer_branch
                  %218 = sbr.rel target = $region53
                $region58: #{tpu_custom_call.1} parent=50 // loop_exit
                  _
              $region51: #{tpu_custom_call.1} parent=35 // pred_fallthru
                _
              // Predicated region
              $region59: #{tpu_custom_call.1} parent=35 // pred_check
                _
              $region60: #{tpu_custom_call.1} parent=35 // pred_check_branch
                %243 = sbr.rel target = $region62
              $region61: #{tpu_custom_call.1} parent=35 // pred_region
                _
              $region62: #{tpu_custom_call.1} parent=35 // pred_fallthru
                _
            $region36: #{tpu_custom_call.1} parent=31 // pred_fallthru
              _
            // Predicated region
            $region37: #{tpu_custom_call.1} parent=31 // pred_check
              _
            $region38: #{tpu_custom_call.1} parent=31 // pred_check_branch
              %190 = sbr.rel target = $region40
            $region39: #{tpu_custom_call.1} parent=31 // pred_region
              loop: start=0, step=1, limit=1
              $region41: #{tpu_custom_call.1} parent=39 // loop_pre_header
                _
              $region42: #{tpu_custom_call.1} parent=39 // loop_header
                %s193 = sphi 0, %s197
                %p194 = scmp.ge.s32.totalorder %s193, 1
                %s198 = sphi %s184, %s184
                %s199 = sphi %s180, %s180
              $region43: #{tpu_custom_call.1} parent=39 // loop_header_branch
                %196 = sbr.rel (%p194) target = $region47
              $region44: #{tpu_custom_call.1} parent=39 // loop_body
                %v200 = vld [vmem:[%s198] sm:$0xff]
                %201 = vst [vmem:[%s199] sm:$0xff] %v200
                %v202 = vld [vmem:[%s198 + $0x10] sm:$0xff]
                %203 = vst [vmem:[%s199 + $0x8] sm:$0xff] %v202
                %v204 = vld [vmem:[%s198 + $0x20] sm:$0xff]
                %205 = vst [vmem:[%s199 + $0x10] sm:$0xff] %v204
                %v206 = vld [vmem:[%s198 + $0x30] sm:$0xff]
                %207 = vst [vmem:[%s199 + $0x18] sm:$0xff] %v206
                %v208 = vld [vmem:[%s198 + $0x40] sm:$0xff]
                %209 = vst [vmem:[%s199 + $0x20] sm:$0xff] %v208
                %v210 = vld [vmem:[%s198 + $0x50] sm:$0xff]
                %211 = vst [vmem:[%s199 + $0x28] sm:$0xff] %v210
                %v212 = vld [vmem:[%s198 + $0x60] sm:$0xff]
                %213 = vst [vmem:[%s199 + $0x30] sm:$0xff] %v212
                %v214 = vld [vmem:[%s198 + $0x70] sm:$0xff]
                %215 = vst [vmem:[%s199 + $0x38] sm:$0xff] %v214
              $region45: #{tpu_custom_call.1} parent=39 // loop_footer
                %s197 = sadd.s32 1, %s193
              $region46: #{tpu_custom_call.1} parent=39 // loop_footer_branch
                %192 = sbr.rel target = $region42
              $region47: #{tpu_custom_call.1} parent=39 // loop_exit
                _
            $region40: #{tpu_custom_call.1} parent=31 // pred_fallthru
              _
          $region32: #{tpu_custom_call.1} parent=27 // pred_fallthru
            _
          %244 = vnop
        $region28: #{tpu_custom_call.1} parent=23 // pred_fallthru
          _
        // Predicated region
        $region63: #{tpu_custom_call.1} parent=23 // pred_check
          %p245 = pneg %p73
        $region64: #{tpu_custom_call.1} parent=23 // pred_check_branch
          %247 = sbr.rel (%p245) target = $region66
        $region65: #{tpu_custom_call.1} parent=23 // pred_region
          %p248 = scmp.lt.s32.totalorder %s20, 1
          %s249 = scalar_select %p248, %s20, 1
          %s250 = smul.addr %s249, 24
          %s251 = smul.addr %s250, 8
          %s252 = scalar_lea.vmem %s1, %s251
        $region66: #{tpu_custom_call.1} parent=23 // pred_fallthru
          _
      $region24: #{tpu_custom_call.1} parent=5 // pred_fallthru
        _
      %p253 = scmp.le.s32.totalorder 1, %s13
      %p254 = scmp.lt.s32.totalorder %s13, 5
      %p255 = pnand %p253, %p254
      %p256 = pneg %p255
      // Predicated region
      $region67: #{tpu_custom_call.1} parent=5 // pred_check
        _
      $region68: #{tpu_custom_call.1} parent=5 // pred_check_branch
        %258 = sbr.rel (%p255) target = $region70
      $region69: #{tpu_custom_call.1} parent=5 // pred_region
        %s259 = ssub.s32 %s13, 1
        %s260 = sand.u32 %s40, 1
        %s261 = sand.u32 %s40, 1
        %s262 = smul.addr %s261, 64
        %s263 = scalar_lea.vmem [#allocation2], %s262
        // Predicated region
        $region71: #{tpu_custom_call.1} parent=69 // pred_check
          %p264 = pneg %p53
        $region72: #{tpu_custom_call.1} parent=69 // pred_check_branch
          %266 = sbr.rel (%p264) target = $region74
        $region73: #{tpu_custom_call.1} parent=69 // pred_region
          _
        $region74: #{tpu_custom_call.1} parent=69 // pred_fallthru
          _
        %s267 = sand.u32 %s40, 1
        %s268 = sand.u32 %s40, 1
        %s269 = smul.addr %s268, 64
        %s270 = scalar_lea.vmem [#allocation2], %s269
        %p271 = pneg %p53
        %p272 = pneg %p50
        %p273 = scmp.lt.s32.totalorder %s22, 1
        %s274 = scalar_select %p273, %s22, 1
        %s275 = smul.addr %s274, 24
        %s276 = smul.addr %s275, 8
        %s277 = scalar_lea.vmem %s1, %s276
        %p278 = pneg %p79
        %p279 = pneg %p76
        %p280 = pneg %p100
        %p281 = pneg %p97
        %p282 = pneg %p121
        %p283 = pneg %p118
        %p284 = pneg %p149
        %p285 = pneg %p146
        %s286 = sand.u32 %s136, 1
        %s287 = scalar_lea.sflag [#allocation4], %s286
        %s288 = sand.u32 %s136, 1
        %s289 = smul.addr %s288, 128
        %s290 = scalar_lea.vmem [#allocation3], %s289
        %p291 = scmp.lt.s32.totalorder %s22, 1
        %s292 = scalar_select %p291, %s22, 1
        %s293 = smul.addr %s292, 24
        %s294 = smul.addr %s293, 8
        %s295 = scalar_lea.vmem %s1, %s294
        %s297 = smul.u32 %s23, 8
        %v298 = vld [vmem:[%s263] sm:$0xff]
        %v299 = vld [vmem:[%s263 + $0x8] sm:$0xff]
        %v300 = vld [vmem:[%s263 + $0x10] sm:$0xff]
        %v301 = vld [vmem:[%s263 + $0x18] sm:$0xff]
        %v302 = vld [vmem:[%s263 + $0x20] sm:$0xff]
        %v303 = vld [vmem:[%s263 + $0x28] sm:$0xff]
        %v304 = vld [vmem:[%s263 + $0x30] sm:$0xff]
        %v305 = vld [vmem:[%s263 + $0x38] sm:$0xff]
        %vm306 = vcmask 130048
        %307 = vst.msk [vmem:[%s290] sm:$0xff] %vm306, %v298
        %308 = vst.msk [vmem:[%s290 + $0x8] sm:$0xff] %vm306, %v299
        %309 = vst.msk [vmem:[%s290 + $0x10] sm:$0xff] %vm306, %v300
        %310 = vst.msk [vmem:[%s290 + $0x18] sm:$0xff] %vm306, %v301
        %311 = vst.msk [vmem:[%s290 + $0x20] sm:$0xff] %vm306, %v302
        %312 = vst.msk [vmem:[%s290 + $0x28] sm:$0xff] %vm306, %v303
        %313 = vst.msk [vmem:[%s290 + $0x30] sm:$0xff] %vm306, %v304
        %314 = vst.msk [vmem:[%s290 + $0x38] sm:$0xff] %vm306, %v305
        %s315 = scalar_lea.vmem %s295, %s297
        %v316 = vld [vmem:[%s315] sm:$0xff]
        %v317 = vld [vmem:[%s315 + $0x8] sm:$0x7]
        %v318 = vld [vmem:[%s315 + $0x18] sm:$0xff]
        %v319 = vld [vmem:[%s315 + $0x20] sm:$0x7]
        %v320 = vld [vmem:[%s315 + $0x30] sm:$0xff]
        %v321 = vld [vmem:[%s315 + $0x38] sm:$0x7]
        %v322 = vld [vmem:[%s315 + $0x48] sm:$0xff]
        %v323 = vld [vmem:[%s315 + $0x50] sm:$0x7]
        %v324 = vld [vmem:[%s315 + $0x60] sm:$0xff]
        %v325 = vld [vmem:[%s315 + $0x68] sm:$0x7]
        %v326 = vld [vmem:[%s315 + $0x78] sm:$0xff]
        %v327 = vld [vmem:[%s315 + $0x80] sm:$0x7]
        %v328 = vld [vmem:[%s315 + $0x90] sm:$0xff]
        %v329 = vld [vmem:[%s315 + $0x98] sm:$0x7]
        %v330 = vld [vmem:[%s315 + $0xa8] sm:$0xff]
        %v331 = vld [vmem:[%s315 + $0xb0] sm:$0x7]
        %v332 = vcombine.low %v316, %v320
        %v333 = vcombine.high %v316, %v320
        %v335 = vunpack.c.l.s4 1983009808
        %v336 = vunpack.c.0.s8 %v335
        %v337 = vlaneseq
        %v338 = vshrl.u32 %v337, 7
        %v339 = vsub.s32 %v336, %v338
        %v340 = vrot.slane %v332, %v339
        %v342 = vunpack.c.l.s4 1983009808
        %v343 = vunpack.c.0.s8 %v342
        %v344 = vlaneseq
        %v345 = vshrl.u32 %v344, 7
        %v346 = vsub.s32 %v343, %v345
        %v347 = vrot.slane %v333, %v346
        %v348 = vcombine.low %v318, %v322
        %v349 = vcombine.high %v318, %v322
        %v351 = vunpack.c.l.s4 1983009808
        %v352 = vunpack.c.0.s8 %v351
        %v353 = vlaneseq
        %v354 = vshrl.u32 %v353, 7
        %v355 = vsub.s32 %v352, %v354
        %v356 = vrot.slane %v348, %v355
        %v358 = vunpack.c.l.s4 1983009808
        %v359 = vunpack.c.0.s8 %v358
        %v360 = vlaneseq
        %v361 = vshrl.u32 %v360, 7
        %v362 = vsub.s32 %v359, %v361
        %v363 = vrot.slane %v349, %v362
        %v364 = vcombine.low %v324, %v328
        %v365 = vcombine.high %v324, %v328
        %v367 = vunpack.c.l.s4 1983009808
        %v368 = vunpack.c.0.s8 %v367
        %v369 = vlaneseq
        %v370 = vshrl.u32 %v369, 7
        %v371 = vsub.s32 %v368, %v370
        %v372 = vrot.slane %v364, %v371
        %v374 = vunpack.c.l.s4 1983009808
        %v375 = vunpack.c.0.s8 %v374
        %v376 = vlaneseq
        %v377 = vshrl.u32 %v376, 7
        %v378 = vsub.s32 %v375, %v377
        %v379 = vrot.slane %v365, %v378
        %v380 = vcombine.low %v326, %v330
        %v381 = vcombine.high %v326, %v330
        %v383 = vunpack.c.l.s4 1983009808
        %v384 = vunpack.c.0.s8 %v383
        %v385 = vlaneseq
        %v386 = vshrl.u32 %v385, 7
        %v387 = vsub.s32 %v384, %v386
        %v388 = vrot.slane %v380, %v387
        %v390 = vunpack.c.l.s4 1983009808
        %v391 = vunpack.c.0.s8 %v390
        %v392 = vlaneseq
        %v393 = vshrl.u32 %v392, 7
        %v394 = vsub.s32 %v391, %v393
        %v395 = vrot.slane %v381, %v394
        %v396 = vcombine.low %v340, %v356
        %v397 = vcombine.high %v340, %v356
        %v399 = vunpack.c.l.s4 1934713408
        %v400 = vunpack.c.0.s8 %v399
        %v401 = vlaneseq
        %v402 = vshrl.u32 %v401, 7
        %v403 = vsub.s32 %v400, %v402
        %v404 = vrot.slane %v396, %v403
        %v406 = vunpack.c.l.s4 1934713408
        %v407 = vunpack.c.0.s8 %v406
        %v408 = vlaneseq
        %v409 = vshrl.u32 %v408, 7
        %v410 = vsub.s32 %v407, %v409
        %v411 = vrot.slane %v397, %v410
        %v412 = vcombine.low %v347, %v363
        %v413 = vcombine.high %v347, %v363
        %v415 = vunpack.c.l.s4 1934713408
        %v416 = vunpack.c.0.s8 %v415
        %v417 = vlaneseq
        %v418 = vshrl.u32 %v417, 7
        %v419 = vsub.s32 %v416, %v418
        %v420 = vrot.slane %v412, %v419
        %v422 = vunpack.c.l.s4 1934713408
        %v423 = vunpack.c.0.s8 %v422
        %v424 = vlaneseq
        %v425 = vshrl.u32 %v424, 7
        %v426 = vsub.s32 %v423, %v425
        %v427 = vrot.slane %v413, %v426
        %v428 = vcombine.low %v372, %v388
        %v429 = vcombine.high %v372, %v388
        %v431 = vunpack.c.l.s4 1934713408
        %v432 = vunpack.c.0.s8 %v431
        %v433 = vlaneseq
        %v434 = vshrl.u32 %v433, 7
        %v435 = vsub.s32 %v432, %v434
        %v436 = vrot.slane %v428, %v435
        %v438 = vunpack.c.l.s4 1934713408
        %v439 = vunpack.c.0.s8 %v438
        %v440 = vlaneseq
        %v441 = vshrl.u32 %v440, 7
        %v442 = vsub.s32 %v439, %v441
        %v443 = vrot.slane %v429, %v442
        %v444 = vcombine.low %v379, %v395
        %v445 = vcombine.high %v379, %v395
        %v447 = vunpack.c.l.s4 1934713408
        %v448 = vunpack.c.0.s8 %v447
        %v449 = vlaneseq
        %v450 = vshrl.u32 %v449, 7
        %v451 = vsub.s32 %v448, %v450
        %v452 = vrot.slane %v444, %v451
        %v454 = vunpack.c.l.s4 1934713408
        %v455 = vunpack.c.0.s8 %v454
        %v456 = vlaneseq
        %v457 = vshrl.u32 %v456, 7
        %v458 = vsub.s32 %v455, %v457
        %v459 = vrot.slane %v445, %v458
        %v460 = vcombine.low %v404, %v436
        %v461 = vcombine.high %v404, %v436
        %v462 = vcombine.low %v411, %v443
        %v463 = vcombine.high %v411, %v443
        %v464 = vcombine.low %v420, %v452
        %v465 = vcombine.high %v420, %v452
        %v466 = vcombine.low %v427, %v459
        %v467 = vcombine.high %v427, %v459
        %v468 = vcombine.low %v317, %v321
        %v470 = vunpack.c.l.s4 1983009808
        %v471 = vunpack.c.0.s8 %v470
        %v472 = vlaneseq
        %v473 = vshrl.u32 %v472, 7
        %v474 = vsub.s32 %v471, %v473
        %v475 = vrot.slane %v468, %v474
        %v476 = vcombine.low %v319, %v323
        %v478 = vunpack.c.l.s4 1983009808
        %v479 = vunpack.c.0.s8 %v478
        %v480 = vlaneseq
        %v481 = vshrl.u32 %v480, 7
        %v482 = vsub.s32 %v479, %v481
        %v483 = vrot.slane %v476, %v482
        %v484 = vcombine.low %v325, %v329
        %v486 = vunpack.c.l.s4 1983009808
        %v487 = vunpack.c.0.s8 %v486
        %v488 = vlaneseq
        %v489 = vshrl.u32 %v488, 7
        %v490 = vsub.s32 %v487, %v489
        %v491 = vrot.slane %v484, %v490
        %v492 = vcombine.low %v327, %v331
        %v494 = vunpack.c.l.s4 1983009808
        %v495 = vunpack.c.0.s8 %v494
        %v496 = vlaneseq
        %v497 = vshrl.u32 %v496, 7
        %v498 = vsub.s32 %v495, %v497
        %v499 = vrot.slane %v492, %v498
        %v500 = vcombine.low %v475, %v483
        %v501 = vcombine.high %v475, %v483
        %v503 = vunpack.c.l.s4 1934713408
        %v504 = vunpack.c.0.s8 %v503
        %v505 = vlaneseq
        %v506 = vshrl.u32 %v505, 7
        %v507 = vsub.s32 %v504, %v506
        %v508 = vrot.slane %v500, %v507
        %v510 = vunpack.c.l.s4 1934713408
        %v511 = vunpack.c.0.s8 %v510
        %v512 = vlaneseq
        %v513 = vshrl.u32 %v512, 7
        %v514 = vsub.s32 %v511, %v513
        %v515 = vrot.slane %v501, %v514
        %v516 = vcombine.low %v491, %v499
        %v517 = vcombine.high %v491, %v499
        %v519 = vunpack.c.l.s4 1934713408
        %v520 = vunpack.c.0.s8 %v519
        %v521 = vlaneseq
        %v522 = vshrl.u32 %v521, 7
        %v523 = vsub.s32 %v520, %v522
        %v524 = vrot.slane %v516, %v523
        %v526 = vunpack.c.l.s4 1934713408
        %v527 = vunpack.c.0.s8 %v526
        %v528 = vlaneseq
        %v529 = vshrl.u32 %v528, 7
        %v530 = vsub.s32 %v527, %v529
        %v531 = vrot.slane %v517, %v530
        %v532 = vcombine.low %v508, %v524
        %v533 = vcombine.high %v508, %v524
        %v534 = vcombine.low %v515, %v531
        %536 = vrot.lane.b32.xlu0 %v461, 18
        %v537 = vpop.permute.xlu0 %536
        %540 = vrot.lane.b32.xlu0 %v462, 36
        %v541 = vpop.permute.xlu0 %540
        %544 = vrot.lane.b32.xlu0 %v463, 54
        %v545 = vpop.permute.xlu0 %544
        %548 = vrot.lane.b32.xlu0 %v464, 72
        %v549 = vpop.permute.xlu0 %548
        %552 = vrot.lane.b32.xlu0 %v465, 90
        %v553 = vpop.permute.xlu0 %552
        %556 = vrot.lane.b32.xlu0 %v466, 108
        %v557 = vpop.permute.xlu0 %556
        %560 = vrot.lane.b32.xlu0 %v467, 126
        %v561 = vpop.permute.xlu0 %560
        %564 = vrot.lane.b32.xlu0 %v532, 16
        %v565 = vpop.permute.xlu0 %564
        %568 = vrot.lane.b32.xlu0 %v533, 34
        %v569 = vpop.permute.xlu0 %568
        %572 = vrot.lane.b32.xlu0 %v534, 52
        %v573 = vpop.permute.xlu0 %572
        %vm575 = vcmask 146432
        %v576 = vsel %vm575, %v460, %v537
        %vm577 = vcmask 293888
        %v578 = vsel %vm577, %v576, %v541
        %vm579 = vcmask 441344
        %v580 = vsel %vm579, %v578, %v545
        %vm581 = vcmask 588800
        %v582 = vsel %vm581, %v580, %v549
        %vm583 = vcmask 736256
        %v584 = vsel %vm583, %v582, %v553
        %vm585 = vcmask 883712
        %v586 = vsel %vm585, %v584, %v557
        %vm587 = vcmask 1031168
        %v588 = vsel %vm587, %v586, %v561
        %v589 = vsel %vm306, %v561, %v565
        %vm590 = vcmask 277504
        %v591 = vsel %vm590, %v589, %v569
        %vm592 = vcmask 424960
        %v593 = vsel %vm592, %v591, %v573
        %v594 = vpack.c.bf16 %v588, %v588
        %v595 = vpack.c.bf16 %v593, %v593
        %v596 = vld [vmem:[%s2] sm:$0xf]
        %s597 = scalar_lea.vmem %s2, 4
        %v598 = vld [vmem:[%s597] sm:$0xf]
        %601 = vrot.lane.b32.xlu0 %v594, 127
        %v602 = vpop.permute.xlu0 %601
        %603 = vrot.lane.b32.xlu0 %v595, 127
        %v604 = vpop.permute.xlu0 %603
        %vm605 = vcmask 1039360
        %v606 = vsel %vm605, %v602, %v604
        %vm607 = vcmask 64512
        %v609 = vsel %vm607, %v598, 0
        %vm611 = vcmask 1043456
        %v613 = vsel %vm611, %v606, 0
        %v616 = vsel %vm611, %v604, 0
        %618 = vmatprep.subr.bf16.mxu0 %v616
        %619 = vmatpush1.bf16.msra.mxu0 %v613
        %620 = vmatprep.subr.bf16.mxu0 0
        %621 = vmatpush1.bf16.msra.mxu0 0
        %622 = vmatprep.subr.bf16.mxu0 0
        %623 = vmatpush1.bf16.msra.mxu0 0
        %624 = vmatprep.subr.bf16.mxu0 0
        %625 = vmatpush1.bf16.msra.mxu0 0
        %626 = vmatprep.subr.bf16.mxu0 0
        %627 = vmatpush1.bf16.msra.mxu0 0
        %628 = vmatprep.subr.bf16.mxu0 0
        %629 = vmatpush1.bf16.msra.mxu0 0
        %630 = vmatprep.subr.bf16.mxu0 0
        %631 = vmatpush1.bf16.msra.mxu0 0
        %632 = vmatprep.subr.bf16.mxu0 0
        %633 = vmatpush1.bf16.msra.mxu0 0
        %634 = vmatprep.subr.bf16.mxu0 0
        %635 = vmatpush1.bf16.msra.mxu0 0
        %636 = vmatprep.subr.bf16.mxu0 0
        %637 = vmatpush1.bf16.msra.mxu0 0
        %638 = vmatprep.subr.bf16.mxu0 0
        %639 = vmatpush1.bf16.msra.mxu0 0
        %640 = vmatprep.subr.bf16.mxu0 0
        %641 = vmatpush1.bf16.msra.mxu0 0
        %642 = vmatprep.subr.bf16.mxu0 0
        %643 = vmatpush1.bf16.msra.mxu0 0
        %644 = vmatprep.subr.bf16.mxu0 0
        %645 = vmatpush1.bf16.msra.mxu0 0
        %646 = vmatprep.subr.bf16.mxu0 0
        %647 = vmatpush1.bf16.msra.mxu0 0
        %648 = vmatprep.subr.bf16.mxu0 0
        %649 = vmatpush1.bf16.msra.mxu0 0
        %650 = vmatprep.mubr.bf16.mxu0 0
        %651 = vmatmul.mubr.bf16.gmra.mrb[0].mxu0 %v609
        %v652 = vpop.f32.mrb[0].mxu0
        %v653 = vadd.f32 0.0, %v652
        %v654 = vpop.f32.mrb[0].mxu0
        %v655 = vadd.f32 0.0, %v654
        %v656 = vpop.f32.mrb[0].mxu0
        %v657 = vpop.f32.mrb[0].mxu0
        %658 = vdwg.mxu0
        %v660 = vsel %vm607, %v596, 0
        %v663 = vsel %vm611, %v594, 0
        %v666 = vsel %vm611, %v595, 0
        %668 = vmatprep.subr.bf16.mxu0 %v666
        %669 = vmatpush1.bf16.msra.mxu0 %v663
        %670 = vmatprep.subr.bf16.mxu0 0
        %671 = vmatpush1.bf16.msra.mxu0 0
        %672 = vmatprep.subr.bf16.mxu0 0
        %673 = vmatpush1.bf16.msra.mxu0 0
        %674 = vmatprep.subr.bf16.mxu0 0
        %675 = vmatpush1.bf16.msra.mxu0 0
        %676 = vmatprep.subr.bf16.mxu0 0
        %677 = vmatpush1.bf16.msra.mxu0 0
        %678 = vmatprep.subr.bf16.mxu0 0
        %679 = vmatpush1.bf16.msra.mxu0 0
        %680 = vmatprep.subr.bf16.mxu0 0
        %681 = vmatpush1.bf16.msra.mxu0 0
        %682 = vmatprep.subr.bf16.mxu0 0
        %683 = vmatpush1.bf16.msra.mxu0 0
        %684 = vmatprep.subr.bf16.mxu0 0
        %685 = vmatpush1.bf16.msra.mxu0 0
        %686 = vmatprep.subr.bf16.mxu0 0
        %687 = vmatpush1.bf16.msra.mxu0 0
        %688 = vmatprep.subr.bf16.mxu0 0
        %689 = vmatpush1.bf16.msra.mxu0 0
        %690 = vmatprep.subr.bf16.mxu0 0
        %691 = vmatpush1.bf16.msra.mxu0 0
        %692 = vmatprep.subr.bf16.mxu0 0
        %693 = vmatpush1.bf16.msra.mxu0 0
        %694 = vmatprep.subr.bf16.mxu0 0
        %695 = vmatpush1.bf16.msra.mxu0 0
        %696 = vmatprep.subr.bf16.mxu0 0
        %697 = vmatpush1.bf16.msra.mxu0 0
        %698 = vmatprep.subr.bf16.mxu0 0
        %699 = vmatpush1.bf16.msra.mxu0 0
        %700 = vmatprep.mubr.bf16.mxu0 0
        %701 = vmatmul.mubr.bf16.gmra.mrb[0].mxu0 %v660
        %v702 = vpop.f32.mrb[0].mxu0
        %v703 = vadd.f32 %v653, %v702
        %v704 = vpop.f32.mrb[0].mxu0
        %v705 = vadd.f32 %v655, %v704
        %v706 = vpop.f32.mrb[0].mxu0
        %v707 = vpop.f32.mrb[0].mxu0
        %708 = vdwg.mxu0
        %s709 = scalar_lea.vmem %s2, 8
        %v710 = vld [vmem:[%s709] sm:$0xf]
        %711 = vrot.lane.b32.xlu0 %v594, 126
        %v712 = vpop.permute.xlu0 %711
        %713 = vrot.lane.b32.xlu0 %v595, 126
        %v714 = vpop.permute.xlu0 %713
        %vm715 = vcmask 1031168
        %v716 = vsel %vm715, %v712, %v714
        %v718 = vsel %vm607, %v710, 0
        %v721 = vsel %vm611, %v716, 0
        %v724 = vsel %vm611, %v714, 0
        %726 = vmatprep.subr.bf16.mxu0 %v724
        %727 = vmatpush1.bf16.msra.mxu0 %v721
        %728 = vmatprep.subr.bf16.mxu0 0
        %729 = vmatpush1.bf16.msra.mxu0 0
        %730 = vmatprep.subr.bf16.mxu0 0
        %731 = vmatpush1.bf16.msra.mxu0 0
        %732 = vmatprep.subr.bf16.mxu0 0
        %733 = vmatpush1.bf16.msra.mxu0 0
        %734 = vmatprep.subr.bf16.mxu0 0
        %735 = vmatpush1.bf16.msra.mxu0 0
        %736 = vmatprep.subr.bf16.mxu0 0
        %737 = vmatpush1.bf16.msra.mxu0 0
        %738 = vmatprep.subr.bf16.mxu0 0
        %739 = vmatpush1.bf16.msra.mxu0 0
        %740 = vmatprep.subr.bf16.mxu0 0
        %741 = vmatpush1.bf16.msra.mxu0 0
        %742 = vmatprep.subr.bf16.mxu0 0
        %743 = vmatpush1.bf16.msra.mxu0 0
        %744 = vmatprep.subr.bf16.mxu0 0
        %745 = vmatpush1.bf16.msra.mxu0 0
        %746 = vmatprep.subr.bf16.mxu0 0
        %747 = vmatpush1.bf16.msra.mxu0 0
        %748 = vmatprep.subr.bf16.mxu0 0
        %749 = vmatpush1.bf16.msra.mxu0 0
        %750 = vmatprep.subr.bf16.mxu0 0
        %751 = vmatpush1.bf16.msra.mxu0 0
        %752 = vmatprep.subr.bf16.mxu0 0
        %753 = vmatpush1.bf16.msra.mxu0 0
        %754 = vmatprep.subr.bf16.mxu0 0
        %755 = vmatpush1.bf16.msra.mxu0 0
        %756 = vmatprep.subr.bf16.mxu0 0
        %757 = vmatpush1.bf16.msra.mxu0 0
        %758 = vmatprep.mubr.bf16.mxu0 0
        %759 = vmatmul.mubr.bf16.gmra.mrb[0].mxu0 %v718
        %v760 = vpop.f32.mrb[0].mxu0
        %v761 = vadd.f32 0.0, %v760
        %v762 = vpop.f32.mrb[0].mxu0
        %v763 = vadd.f32 0.0, %v762
        %v764 = vpop.f32.mrb[0].mxu0
        %v765 = vpop.f32.mrb[0].mxu0
        %766 = vdwg.mxu0
        %v767 = vadd.f32 %v703, %v761
        %v768 = vadd.f32 %v705, %v763
        %s769 = scalar_lea.vmem %s2, 12
        %v770 = vld [vmem:[%s769] sm:$0xf]
        %771 = vrot.lane.b32.xlu0 %v594, 110
        %v772 = vpop.permute.xlu0 %771
        %773 = vrot.lane.b32.xlu0 %v595, 110
        %v774 = vpop.permute.xlu0 %773
        %vm775 = vcmask 900096
        %v776 = vsel %vm775, %v772, %v774
        %v778 = vsel %vm607, %v770, 0
        %v781 = vsel %vm611, %v776, 0
        %v784 = vsel %vm611, %v774, 0
        %786 = vmatprep.subr.bf16.mxu0 %v784
        %787 = vmatpush1.bf16.msra.mxu0 %v781
        %788 = vmatprep.subr.bf16.mxu0 0
        %789 = vmatpush1.bf16.msra.mxu0 0
        %790 = vmatprep.subr.bf16.mxu0 0
        %791 = vmatpush1.bf16.msra.mxu0 0
        %792 = vmatprep.subr.bf16.mxu0 0
        %793 = vmatpush1.bf16.msra.mxu0 0
        %794 = vmatprep.subr.bf16.mxu0 0
        %795 = vmatpush1.bf16.msra.mxu0 0
        %796 = vmatprep.subr.bf16.mxu0 0
        %797 = vmatpush1.bf16.msra.mxu0 0
        %798 = vmatprep.subr.bf16.mxu0 0
        %799 = vmatpush1.bf16.msra.mxu0 0
        %800 = vmatprep.subr.bf16.mxu0 0
        %801 = vmatpush1.bf16.msra.mxu0 0
        %802 = vmatprep.subr.bf16.mxu0 0
        %803 = vmatpush1.bf16.msra.mxu0 0
        %804 = vmatprep.subr.bf16.mxu0 0
        %805 = vmatpush1.bf16.msra.mxu0 0
        %806 = vmatprep.subr.bf16.mxu0 0
        %807 = vmatpush1.bf16.msra.mxu0 0
        %808 = vmatprep.subr.bf16.mxu0 0
        %809 = vmatpush1.bf16.msra.mxu0 0
        %810 = vmatprep.subr.bf16.mxu0 0
        %811 = vmatpush1.bf16.msra.mxu0 0
        %812 = vmatprep.subr.bf16.mxu0 0
        %813 = vmatpush1.bf16.msra.mxu0 0
        %814 = vmatprep.subr.bf16.mxu0 0
        %815 = vmatpush1.bf16.msra.mxu0 0
        %816 = vmatprep.subr.bf16.mxu0 0
        %817 = vmatpush1.bf16.msra.mxu0 0
        %818 = vmatprep.mubr.bf16.mxu0 0
        %819 = vmatmul.mubr.bf16.gmra.mrb[0].mxu0 %v778
        %v820 = vpop.f32.mrb[0].mxu0
        %v821 = vadd.f32 0.0, %v820
        %v822 = vpop.f32.mrb[0].mxu0
        %v823 = vadd.f32 0.0, %v822
        %v824 = vpop.f32.mrb[0].mxu0
        %v825 = vpop.f32.mrb[0].mxu0
        %826 = vdwg.mxu0
        %v827 = vadd.f32 %v767, %v821
        %v828 = vadd.f32 %v768, %v823
        %s829 = scalar_lea.vmem %s2, 16
        %v830 = vld [vmem:[%s829] sm:$0xf]
        %831 = vrot.lane.b32.xlu0 %v594, 109
        %v832 = vpop.permute.xlu0 %831
        %833 = vrot.lane.b32.xlu0 %v595, 109
        %v834 = vpop.permute.xlu0 %833
        %vm835 = vcmask 891904
        %v836 = vsel %vm835, %v832, %v834
        %v838 = vsel %vm607, %v830, 0
        %v841 = vsel %vm611, %v836, 0
        %v844 = vsel %vm611, %v834, 0
        %846 = vmatprep.subr.bf16.mxu0 %v844
        %847 = vmatpush1.bf16.msra.mxu0 %v841
        %848 = vmatprep.subr.bf16.mxu0 0
        %849 = vmatpush1.bf16.msra.mxu0 0
        %850 = vmatprep.subr.bf16.mxu0 0
        %851 = vmatpush1.bf16.msra.mxu0 0
        %852 = vmatprep.subr.bf16.mxu0 0
        %853 = vmatpush1.bf16.msra.mxu0 0
        %854 = vmatprep.subr.bf16.mxu0 0
        %855 = vmatpush1.bf16.msra.mxu0 0
        %856 = vmatprep.subr.bf16.mxu0 0
        %857 = vmatpush1.bf16.msra.mxu0 0
        %858 = vmatprep.subr.bf16.mxu0 0
        %859 = vmatpush1.bf16.msra.mxu0 0
        %860 = vmatprep.subr.bf16.mxu0 0
        %861 = vmatpush1.bf16.msra.mxu0 0
        %862 = vmatprep.subr.bf16.mxu0 0
        %863 = vmatpush1.bf16.msra.mxu0 0
        %864 = vmatprep.subr.bf16.mxu0 0
        %865 = vmatpush1.bf16.msra.mxu0 0
        %866 = vmatprep.subr.bf16.mxu0 0
        %867 = vmatpush1.bf16.msra.mxu0 0
        %868 = vmatprep.subr.bf16.mxu0 0
        %869 = vmatpush1.bf16.msra.mxu0 0
        %870 = vmatprep.subr.bf16.mxu0 0
        %871 = vmatpush1.bf16.msra.mxu0 0
        %872 = vmatprep.subr.bf16.mxu0 0
        %873 = vmatpush1.bf16.msra.mxu0 0
        %874 = vmatprep.subr.bf16.mxu0 0
        %875 = vmatpush1.bf16.msra.mxu0 0
        %876 = vmatprep.subr.bf16.mxu0 0
        %877 = vmatpush1.bf16.msra.mxu0 0
        %878 = vmatprep.mubr.bf16.mxu0 0
        %879 = vmatmul.mubr.bf16.gmra.mrb[0].mxu0 %v838
        %v880 = vpop.f32.mrb[0].mxu0
        %v881 = vadd.f32 0.0, %v880
        %v882 = vpop.f32.mrb[0].mxu0
        %v883 = vadd.f32 0.0, %v882
        %v884 = vpop.f32.mrb[0].mxu0
        %v885 = vpop.f32.mrb[0].mxu0
        %886 = vdwg.mxu0
        %v887 = vadd.f32 %v827, %v881
        %v888 = vadd.f32 %v828, %v883
        %s889 = scalar_lea.vmem %s2, 20
        %v890 = vld [vmem:[%s889] sm:$0xf]
        %891 = vrot.lane.b32.xlu0 %v594, 108
        %v892 = vpop.permute.xlu0 %891
        %893 = vrot.lane.b32.xlu0 %v595, 108
        %v894 = vpop.permute.xlu0 %893
        %vm895 = vcmask 883712
        %v896 = vsel %vm895, %v892, %v894
        %v898 = vsel %vm607, %v890, 0
        %v901 = vsel %vm611, %v896, 0
        %v904 = vsel %vm611, %v894, 0
        %906 = vmatprep.subr.bf16.mxu0 %v904
        %907 = vmatpush1.bf16.msra.mxu0 %v901
        %908 = vmatprep.subr.bf16.mxu0 0
        %909 = vmatpush1.bf16.msra.mxu0 0
        %910 = vmatprep.subr.bf16.mxu0 0
        %911 = vmatpush1.bf16.msra.mxu0 0
        %912 = vmatprep.subr.bf16.mxu0 0
        %913 = vmatpush1.bf16.msra.mxu0 0
        %914 = vmatprep.subr.bf16.mxu0 0
        %915 = vmatpush1.bf16.msra.mxu0 0
        %916 = vmatprep.subr.bf16.mxu0 0
        %917 = vmatpush1.bf16.msra.mxu0 0
        %918 = vmatprep.subr.bf16.mxu0 0
        %919 = vmatpush1.bf16.msra.mxu0 0
        %920 = vmatprep.subr.bf16.mxu0 0
        %921 = vmatpush1.bf16.msra.mxu0 0
        %922 = vmatprep.subr.bf16.mxu0 0
        %923 = vmatpush1.bf16.msra.mxu0 0
        %924 = vmatprep.subr.bf16.mxu0 0
        %925 = vmatpush1.bf16.msra.mxu0 0
        %926 = vmatprep.subr.bf16.mxu0 0
        %927 = vmatpush1.bf16.msra.mxu0 0
        %928 = vmatprep.subr.bf16.mxu0 0
        %929 = vmatpush1.bf16.msra.mxu0 0
        %930 = vmatprep.subr.bf16.mxu0 0
        %931 = vmatpush1.bf16.msra.mxu0 0
        %932 = vmatprep.subr.bf16.mxu0 0
        %933 = vmatpush1.bf16.msra.mxu0 0
        %934 = vmatprep.subr.bf16.mxu0 0
        %935 = vmatpush1.bf16.msra.mxu0 0
        %936 = vmatprep.subr.bf16.mxu0 0
        %937 = vmatpush1.bf16.msra.mxu0 0
        %938 = vmatprep.mubr.bf16.mxu0 0
        %939 = vmatmul.mubr.bf16.gmra.mrb[0].mxu0 %v898
        %v940 = vpop.f32.mrb[0].mxu0
        %v941 = vadd.f32 0.0, %v940
        %v942 = vpop.f32.mrb[0].mxu0
        %v943 = vadd.f32 0.0, %v942
        %v944 = vpop.f32.mrb[0].mxu0
        %v945 = vpop.f32.mrb[0].mxu0
        %946 = vdwg.mxu0
        %v947 = vadd.f32 %v887, %v941
        %v948 = vadd.f32 %v888, %v943
        %s949 = scalar_lea.vmem %s2, 24
        %v950 = vld [vmem:[%s949] sm:$0xf]
        %951 = vrot.lane.b32.xlu0 %v594, 92
        %v952 = vpop.permute.xlu0 %951
        %953 = vrot.lane.b32.xlu0 %v595, 92
        %v954 = vpop.permute.xlu0 %953
        %vm955 = vcmask 752640
        %v956 = vsel %vm955, %v952, %v954
        %v958 = vsel %vm607, %v950, 0
        %v961 = vsel %vm611, %v956, 0
        %v964 = vsel %vm611, %v954, 0
        %966 = vmatprep.subr.bf16.mxu0 %v964
        %967 = vmatpush1.bf16.msra.mxu0 %v961
        %968 = vmatprep.subr.bf16.mxu0 0
        %969 = vmatpush1.bf16.msra.mxu0 0
        %970 = vmatprep.subr.bf16.mxu0 0
        %971 = vmatpush1.bf16.msra.mxu0 0
        %972 = vmatprep.subr.bf16.mxu0 0
        %973 = vmatpush1.bf16.msra.mxu0 0
        %974 = vmatprep.subr.bf16.mxu0 0
        %975 = vmatpush1.bf16.msra.mxu0 0
        %976 = vmatprep.subr.bf16.mxu0 0
        %977 = vmatpush1.bf16.msra.mxu0 0
        %978 = vmatprep.subr.bf16.mxu0 0
        %979 = vmatpush1.bf16.msra.mxu0 0
        %980 = vmatprep.subr.bf16.mxu0 0
        %981 = vmatpush1.bf16.msra.mxu0 0
        %982 = vmatprep.subr.bf16.mxu0 0
        %983 = vmatpush1.bf16.msra.mxu0 0
        %984 = vmatprep.subr.bf16.mxu0 0
        %985 = vmatpush1.bf16.msra.mxu0 0
        %986 = vmatprep.subr.bf16.mxu0 0
        %987 = vmatpush1.bf16.msra.mxu0 0
        %988 = vmatprep.subr.bf16.mxu0 0
        %989 = vmatpush1.bf16.msra.mxu0 0
        %990 = vmatprep.subr.bf16.mxu0 0
        %991 = vmatpush1.bf16.msra.mxu0 0
        %992 = vmatprep.subr.bf16.mxu0 0
        %993 = vmatpush1.bf16.msra.mxu0 0
        %994 = vmatprep.subr.bf16.mxu0 0
        %995 = vmatpush1.bf16.msra.mxu0 0
        %996 = vmatprep.subr.bf16.mxu0 0
        %997 = vmatpush1.bf16.msra.mxu0 0
        %998 = vmatprep.mubr.bf16.mxu0 0
        %999 = vmatmul.mubr.bf16.gmra.mrb[0].mxu0 %v958
        %v1000 = vpop.f32.mrb[0].mxu0
        %v1001 = vadd.f32 0.0, %v1000
        %v1002 = vpop.f32.mrb[0].mxu0
        %v1003 = vadd.f32 0.0, %v1002
        %v1004 = vpop.f32.mrb[0].mxu0
        %v1005 = vpop.f32.mrb[0].mxu0
        %1006 = vdwg.mxu0
        %v1007 = vadd.f32 %v947, %v1001
        %v1008 = vadd.f32 %v948, %v1003
        %s1009 = scalar_lea.vmem %s2, 28
        %v1010 = vld [vmem:[%s1009] sm:$0xf]
        %1011 = vrot.lane.b32.xlu0 %v594, 91
        %v1012 = vpop.permute.xlu0 %1011
        %1013 = vrot.lane.b32.xlu0 %v595, 91
        %v1014 = vpop.permute.xlu0 %1013
        %vm1015 = vcmask 744448
        %v1016 = vsel %vm1015, %v1012, %v1014
        %v1018 = vsel %vm607, %v1010, 0
        %v1021 = vsel %vm611, %v1016, 0
        %v1024 = vsel %vm611, %v1014, 0
        %1026 = vmatprep.subr.bf16.mxu0 %v1024
        %1027 = vmatpush1.bf16.msra.mxu0 %v1021
        %1028 = vmatprep.subr.bf16.mxu0 0
        %1029 = vmatpush1.bf16.msra.mxu0 0
        %1030 = vmatprep.subr.bf16.mxu0 0
        %1031 = vmatpush1.bf16.msra.mxu0 0
        %1032 = vmatprep.subr.bf16.mxu0 0
        %1033 = vmatpush1.bf16.msra.mxu0 0
        %1034 = vmatprep.subr.bf16.mxu0 0
        %1035 = vmatpush1.bf16.msra.mxu0 0
        %1036 = vmatprep.subr.bf16.mxu0 0
        %1037 = vmatpush1.bf16.msra.mxu0 0
        %1038 = vmatprep.subr.bf16.mxu0 0
        %1039 = vmatpush1.bf16.msra.mxu0 0
        %1040 = vmatprep.subr.bf16.mxu0 0
        %1041 = vmatpush1.bf16.msra.mxu0 0
        %1042 = vmatprep.subr.bf16.mxu0 0
        %1043 = vmatpush1.bf16.msra.mxu0 0
        %1044 = vmatprep.subr.bf16.mxu0 0
        %1045 = vmatpush1.bf16.msra.mxu0 0
        %1046 = vmatprep.subr.bf16.mxu0 0
        %1047 = vmatpush1.bf16.msra.mxu0 0
        %1048 = vmatprep.subr.bf16.mxu0 0
        %1049 = vmatpush1.bf16.msra.mxu0 0
        %1050 = vmatprep.subr.bf16.mxu0 0
        %1051 = vmatpush1.bf16.msra.mxu0 0
        %1052 = vmatprep.subr.bf16.mxu0 0
        %1053 = vmatpush1.bf16.msra.mxu0 0
        %1054 = vmatprep.subr.bf16.mxu0 0
        %1055 = vmatpush1.bf16.msra.mxu0 0
        %1056 = vmatprep.subr.bf16.mxu0 0
        %1057 = vmatpush1.bf16.msra.mxu0 0
        %1058 = vmatprep.mubr.bf16.mxu0 0
        %1059 = vmatmul.mubr.bf16.gmra.mrb[0].mxu0 %v1018
        %v1060 = vpop.f32.mrb[0].mxu0
        %v1061 = vadd.f32 0.0, %v1060
        %v1062 = vpop.f32.mrb[0].mxu0
        %v1063 = vadd.f32 0.0, %v1062
        %v1064 = vpop.f32.mrb[0].mxu0
        %v1065 = vpop.f32.mrb[0].mxu0
        %1066 = vdwg.mxu0
        %v1067 = vadd.f32 %v1007, %v1061
        %v1068 = vadd.f32 %v1008, %v1063
        %s1069 = scalar_lea.vmem %s2, 32
        %v1070 = vld [vmem:[%s1069] sm:$0xf]
        %1071 = vrot.lane.b32.xlu0 %v594, 90
        %v1072 = vpop.permute.xlu0 %1071
        %1073 = vrot.lane.b32.xlu0 %v595, 90
        %v1074 = vpop.permute.xlu0 %1073
        %vm1075 = vcmask 736256
        %v1076 = vsel %vm1075, %v1072, %v1074
        %v1078 = vsel %vm607, %v1070, 0
        %v1081 = vsel %vm611, %v1076, 0
        %v1084 = vsel %vm611, %v1074, 0
        %1086 = vmatprep.subr.bf16.mxu0 %v1084
        %1087 = vmatpush1.bf16.msra.mxu0 %v1081
        %1088 = vmatprep.subr.bf16.mxu0 0
        %1089 = vmatpush1.bf16.msra.mxu0 0
        %1090 = vmatprep.subr.bf16.mxu0 0
        %1091 = vmatpush1.bf16.msra.mxu0 0
        %1092 = vmatprep.subr.bf16.mxu0 0
        %1093 = vmatpush1.bf16.msra.mxu0 0
        %1094 = vmatprep.subr.bf16.mxu0 0
        %1095 = vmatpush1.bf16.msra.mxu0 0
        %1096 = vmatprep.subr.bf16.mxu0 0
        %1097 = vmatpush1.bf16.msra.mxu0 0
        %1098 = vmatprep.subr.bf16.mxu0 0
        %1099 = vmatpush1.bf16.msra.mxu0 0
        %1100 = vmatprep.subr.bf16.mxu0 0
        %1101 = vmatpush1.bf16.msra.mxu0 0
        %1102 = vmatprep.subr.bf16.mxu0 0
        %1103 = vmatpush1.bf16.msra.mxu0 0
        %1104 = vmatprep.subr.bf16.mxu0 0
        %1105 = vmatpush1.bf16.msra.mxu0 0
        %1106 = vmatprep.subr.bf16.mxu0 0
        %1107 = vmatpush1.bf16.msra.mxu0 0
        %1108 = vmatprep.subr.bf16.mxu0 0
        %1109 = vmatpush1.bf16.msra.mxu0 0
        %1110 = vmatprep.subr.bf16.mxu0 0
        %1111 = vmatpush1.bf16.msra.mxu0 0
        %1112 = vmatprep.subr.bf16.mxu0 0
        %1113 = vmatpush1.bf16.msra.mxu0 0
        %1114 = vmatprep.subr.bf16.mxu0 0
        %1115 = vmatpush1.bf16.msra.mxu0 0
        %1116 = vmatprep.subr.bf16.mxu0 0
        %1117 = vmatpush1.bf16.msra.mxu0 0
        %1118 = vmatprep.mubr.bf16.mxu0 0
        %1119 = vmatmul.mubr.bf16.gmra.mrb[0].mxu0 %v1078
        %v1120 = vpop.f32.mrb[0].mxu0
        %v1121 = vadd.f32 0.0, %v1120
        %v1122 = vpop.f32.mrb[0].mxu0
        %v1123 = vadd.f32 0.0, %v1122
        %v1124 = vpop.f32.mrb[0].mxu0
        %v1125 = vpop.f32.mrb[0].mxu0
        %1126 = vdwg.mxu0
        %v1127 = vadd.f32 %v1067, %v1121
        %v1128 = vadd.f32 %v1068, %v1123
        %v1129 = vld [vmem:[%s3] sm:$0xff]
        %1131 = vset.pattern.permute.xlu0 0
        %1132 = vperm.xlu0 %1131, %v1129
        %v1133 = vpop.permute.xlu0 %1132
        %v1135 = vadd.f32 %v1127, %v1133
        %v1136 = vadd.f32 %v1128, %v1133
        %v1137 = vmax.f32 %v1135, 0.0
        %v1138 = vmax.f32 %v1136, 0.0
        %1140 = vrot.lane.b32.xlu0 %v1137, 110
        %v1141 = vpop.permute.xlu0 %1140
        %1143 = vrot.lane.b32.xlu0 %v1137, 92
        %v1144 = vpop.permute.xlu0 %1143
        %1146 = vrot.lane.b32.xlu0 %v1137, 74
        %v1147 = vpop.permute.xlu0 %1146
        %1149 = vrot.lane.b32.xlu0 %v1137, 56
        %v1150 = vpop.permute.xlu0 %1149
        %1152 = vrot.lane.b32.xlu0 %v1137, 38
        %v1153 = vpop.permute.xlu0 %1152
        %1155 = vrot.lane.b32.xlu0 %v1137, 20
        %v1156 = vpop.permute.xlu0 %1155
        %1159 = vrot.lane.b32.xlu0 %v1137, 2
        %v1160 = vpop.permute.xlu0 %1159
        %1161 = vrot.lane.b32.xlu0 %v1138, 2
        %v1162 = vpop.permute.xlu0 %1161
        %vm1163 = vcmask 15360
        %v1164 = vsel %vm1163, %v1160, %v1162
        %v1166 = vcombine.low %v1137, %v1144
        %v1167 = vcombine.high %v1137, %v1144
        %v1169 = vunpack.c.l.s4 1983009808
        %v1170 = vunpack.c.0.s8 %v1169
        %v1171 = vlaneseq
        %v1172 = vshrl.u32 %v1171, 7
        %v1173 = vsub.s32 %v1170, %v1172
        %v1174 = vrot.slane %v1166, %v1173
        %v1176 = vunpack.c.l.s4 1983009808
        %v1177 = vunpack.c.0.s8 %v1176
        %v1178 = vlaneseq
        %v1179 = vshrl.u32 %v1178, 7
        %v1180 = vsub.s32 %v1177, %v1179
        %v1181 = vrot.slane %v1167, %v1180
        %v1182 = vcombine.low %v1141, %v1147
        %v1183 = vcombine.high %v1141, %v1147
        %v1185 = vunpack.c.l.s4 1983009808
        %v1186 = vunpack.c.0.s8 %v1185
        %v1187 = vlaneseq
        %v1188 = vshrl.u32 %v1187, 7
        %v1189 = vsub.s32 %v1186, %v1188
        %v1190 = vrot.slane %v1182, %v1189
        %v1192 = vunpack.c.l.s4 1983009808
        %v1193 = vunpack.c.0.s8 %v1192
        %v1194 = vlaneseq
        %v1195 = vshrl.u32 %v1194, 7
        %v1196 = vsub.s32 %v1193, %v1195
        %v1197 = vrot.slane %v1183, %v1196
        %v1198 = vcombine.low %v1150, %v1156
        %v1199 = vcombine.high %v1150, %v1156
        %v1201 = vunpack.c.l.s4 1983009808
        %v1202 = vunpack.c.0.s8 %v1201
        %v1203 = vlaneseq
        %v1204 = vshrl.u32 %v1203, 7
        %v1205 = vsub.s32 %v1202, %v1204
        %v1206 = vrot.slane %v1198, %v1205
        %v1208 = vunpack.c.l.s4 1983009808
        %v1209 = vunpack.c.0.s8 %v1208
        %v1210 = vlaneseq
        %v1211 = vshrl.u32 %v1210, 7
        %v1212 = vsub.s32 %v1209, %v1211
        %v1213 = vrot.slane %v1199, %v1212
        %v1214 = vcombine.low %v1153, %v1164
        %v1215 = vcombine.high %v1153, %v1164
        %v1217 = vunpack.c.l.s4 1983009808
        %v1218 = vunpack.c.0.s8 %v1217
        %v1219 = vlaneseq
        %v1220 = vshrl.u32 %v1219, 7
        %v1221 = vsub.s32 %v1218, %v1220
        %v1222 = vrot.slane %v1214, %v1221
        %v1224 = vunpack.c.l.s4 1983009808
        %v1225 = vunpack.c.0.s8 %v1224
        %v1226 = vlaneseq
        %v1227 = vshrl.u32 %v1226, 7
        %v1228 = vsub.s32 %v1225, %v1227
        %v1229 = vrot.slane %v1215, %v1228
        %v1230 = vcombine.low %v1174, %v1190
        %v1231 = vcombine.high %v1174, %v1190
        %v1233 = vunpack.c.l.s4 1934713408
        %v1234 = vunpack.c.0.s8 %v1233
        %v1235 = vlaneseq
        %v1236 = vshrl.u32 %v1235, 7
        %v1237 = vsub.s32 %v1234, %v1236
        %v1238 = vrot.slane %v1230, %v1237
        %v1240 = vunpack.c.l.s4 1934713408
        %v1241 = vunpack.c.0.s8 %v1240
        %v1242 = vlaneseq
        %v1243 = vshrl.u32 %v1242, 7
        %v1244 = vsub.s32 %v1241, %v1243
        %v1245 = vrot.slane %v1231, %v1244
        %v1246 = vcombine.low %v1181, %v1197
        %v1247 = vcombine.high %v1181, %v1197
        %v1249 = vunpack.c.l.s4 1934713408
        %v1250 = vunpack.c.0.s8 %v1249
        %v1251 = vlaneseq
        %v1252 = vshrl.u32 %v1251, 7
        %v1253 = vsub.s32 %v1250, %v1252
        %v1254 = vrot.slane %v1246, %v1253
        %v1256 = vunpack.c.l.s4 1934713408
        %v1257 = vunpack.c.0.s8 %v1256
        %v1258 = vlaneseq
        %v1259 = vshrl.u32 %v1258, 7
        %v1260 = vsub.s32 %v1257, %v1259
        %v1261 = vrot.slane %v1247, %v1260
        %v1262 = vcombine.low %v1206, %v1222
        %v1263 = vcombine.high %v1206, %v1222
        %v1265 = vunpack.c.l.s4 1934713408
        %v1266 = vunpack.c.0.s8 %v1265
        %v1267 = vlaneseq
        %v1268 = vshrl.u32 %v1267, 7
        %v1269 = vsub.s32 %v1266, %v1268
        %v1270 = vrot.slane %v1262, %v1269
        %v1272 = vunpack.c.l.s4 1934713408
        %v1273 = vunpack.c.0.s8 %v1272
        %v1274 = vlaneseq
        %v1275 = vshrl.u32 %v1274, 7
        %v1276 = vsub.s32 %v1273, %v1275
        %v1277 = vrot.slane %v1263, %v1276
        %v1278 = vcombine.low %v1213, %v1229
        %v1279 = vcombine.high %v1213, %v1229
        %v1281 = vunpack.c.l.s4 1934713408
        %v1282 = vunpack.c.0.s8 %v1281
        %v1283 = vlaneseq
        %v1284 = vshrl.u32 %v1283, 7
        %v1285 = vsub.s32 %v1282, %v1284
        %v1286 = vrot.slane %v1278, %v1285
        %v1288 = vunpack.c.l.s4 1934713408
        %v1289 = vunpack.c.0.s8 %v1288
        %v1290 = vlaneseq
        %v1291 = vshrl.u32 %v1290, 7
        %v1292 = vsub.s32 %v1289, %v1291
        %v1293 = vrot.slane %v1279, %v1292
        %v1294 = vcombine.low %v1238, %v1270
        %v1295 = vcombine.high %v1238, %v1270
        %v1296 = vcombine.low %v1245, %v1277
        %v1297 = vcombine.high %v1245, %v1277
        %v1298 = vcombine.low %v1254, %v1286
        %v1299 = vcombine.high %v1254, %v1286
        %v1300 = vcombine.low %v1261, %v1293
        %v1301 = vcombine.high %v1261, %v1293
        %s1302 = scalar_lea.vmem %s290, 64 [#allocation3]
        %1303 = vst.msk [vmem:[%s1302] sm:$0xff] %vm306, %v1294
        %1304 = vst.msk [vmem:[%s1302 + $0x8] sm:$0xff] %vm306, %v1295
        %1305 = vst.msk [vmem:[%s1302 + $0x10] sm:$0xff] %vm306, %v1296
        %1306 = vst.msk [vmem:[%s1302 + $0x18] sm:$0xff] %vm306, %v1297
        %1307 = vst.msk [vmem:[%s1302 + $0x20] sm:$0xff] %vm306, %v1298
        %1308 = vst.msk [vmem:[%s1302 + $0x28] sm:$0xff] %vm306, %v1299
        %1309 = vst.msk [vmem:[%s1302 + $0x30] sm:$0xff] %vm306, %v1300
        %1310 = vst.msk [vmem:[%s1302 + $0x38] sm:$0xff] %vm306, %v1301
        %s1311 = sand.u32 %s136, 1
        %s1312 = scalar_lea.sflag [#allocation4], %s1311
        %s1313 = sand.u32 %s136, 1
        %s1314 = smul.addr %s1313, 128
        %s1315 = scalar_lea.vmem [#allocation3], %s1314
        // Predicated region
        $region75: #{tpu_custom_call.1} parent=69 // pred_check
          %p1316 = pneg %p146
        $region76: #{tpu_custom_call.1} parent=69 // pred_check_branch
          %1318 = sbr.rel (%p1316) target = $region78
        $region77: #{tpu_custom_call.1} parent=69 // pred_region
          %s1320 = ssub.s32 2048, 2048
          %1321 = vsyncadd %s1312, %s1320
          %s1322 = smul.addr %s22, 32
          %s1323 = sadd.s32 %s23, %s1322
          %s1324 = smul.addr %s1323, 128
          %s1325 = scalar_lea.hbm %s4, %s1324
          %s1326 = sshll.u32 %s1315, 4
          %s1327 = int_to_ptr.vmem [resolvable:$true] %s1326
          %1332 = dma.vmem_to_hbm [thread:$0]  %s1327, 2048, %s1325, %s1312, 128, 256, 8
        $region78: #{tpu_custom_call.1} parent=69 // pred_fallthru
          _
      $region70: #{tpu_custom_call.1} parent=5 // pred_fallthru
        _
      %p1333 = scmp.le.s32.totalorder 2, %s13
      // Predicated region
      $region79: #{tpu_custom_call.1} parent=5 // pred_check
        %p1334 = pneg %p1333
      $region80: #{tpu_custom_call.1} parent=5 // pred_check_branch
        %1336 = sbr.rel (%p1334) target = $region82
      $region81: #{tpu_custom_call.1} parent=5 // pred_region
        %s1337 = ssub.s32 %s13, 2
        // Predicated region
        $region83: #{tpu_custom_call.1} parent=81 // pred_check
          %p1338 = pneg %p152
        $region84: #{tpu_custom_call.1} parent=81 // pred_check_branch
          %1340 = sbr.rel (%p1338) target = $region86
        $region85: #{tpu_custom_call.1} parent=81 // pred_region
          %s1341 = sand.u32 %s137, 1
          %s1342 = scalar_lea.sflag [#allocation4], %s1341
          %s1343 = sand.u32 %s137, 1
          %s1344 = smul.addr %s1343, 128
          %s1345 = scalar_lea.vmem [#allocation3], %s1344
          %1346 = dma.done %s1342, 2048
        $region86: #{tpu_custom_call.1} parent=81 // pred_fallthru
          _
      $region82: #{tpu_custom_call.1} parent=5 // pred_fallthru
        _
    $region6: #{tpu_custom_call.1} parent=1 // loop_footer
      %s17 = sadd.s32 1, %s13
    $region7: #{tpu_custom_call.1} parent=1 // loop_footer_branch
      %12 = sbr.rel target = $region3
    $region8: #{tpu_custom_call.1} parent=1 // loop_exit
      _
    %1347 = vsyncpa [#allocation4], 1
    %s1348 = scalar_lea.sflag [#allocation4], 1
    %1349 = vsyncpa %s1348, 1

</llo_original>
